<compile_context>
chip_gen: v5e
topology: v5e:2x2
jax: 0.10.0
libtpu: 0.0.40
codegen_flags: <defaults>
</compile_context>

<pallas_src>
import functools

import numpy as np
import jax
import jax.numpy as jnp
from jax.experimental import pallas as pl
from jax.experimental.pallas import tpu as pltpu


# ---------------------------------------------------------------------------
# Pallas kernel
# ---------------------------------------------------------------------------
def _frh_kernel(x_ref, halo_ref, res_ref, w_ref, o_ref, *, h_in, tail_fix,
                ups_dtype):
    """One (batch, output-row-tile) grid step.

    x_ref    : (1, TH_IN, W, Cd)      low-res decoder feature rows of the tile
    halo_ref : (1, 1, 2, W, Cd)       clamped rows above/below the tile
    res_ref  : (1, TH2, W, 2*Cin)     skip feature, column-paired layout
    w_ref    : (2*Cin, 2*Cd)          block-diagonal 1x1-conv weight
    o_ref    : (1, TH_IN, 2, W, 2*Cd) output (row-phase, column-paired layout)
    """
    f32 = jnp.float32
    x = x_ref[0].astype(ups_dtype)                  # (TH_IN, W, Cd)
    x_top = halo_ref[0, 0, 0].astype(ups_dtype)     # (W, Cd)
    x_bot = halo_ref[0, 0, 1].astype(ups_dtype)     # (W, Cd)
    th_in, w_cols, cd = x.shape

    # Rows extended with the clamped halo rows supplied by the wrapper.
    xe = jnp.concatenate([x_top[None], x, x_bot[None]], axis=0)  # (TH_IN+2,W,Cd)

    # ---- W-direction 2x bilinear (VPU 2-tap shift-and-add) ----------------
    #   out[:, 2w]   = 0.75 * x[:, w] + 0.25 * x[:, max(w-1, 0)]
    #   out[:, 2w+1] = 0.75 * x[:, w] + 0.25 * x[:, min(w+1, W-1)]
    xl = jnp.concatenate([xe[:, :1], xe[:, :w_cols - 1]], axis=1)   # col w-1
    xr = jnp.concatenate([xe[:, 1:], xe[:, w_cols - 1:]], axis=1)   # col w+1
    # column-paired layout: lane dim = [Cd of col 2w | Cd of col 2w+1]
    xp = jnp.concatenate([0.75 * xe + 0.25 * xl,
                          0.75 * xe + 0.25 * xr], axis=-1)  # (TH_IN+2, W, 2Cd)

    # ---- H-direction 2x bilinear ------------------------------------------
    cur = xp[1:th_in + 1]
    up = xp[:th_in]
    dn = xp[2:th_in + 2]
    if tail_fix:
        # Tail tile (TH_IN does not divide H): rows past the image end hold
        # unspecified values; clamp the bottom neighbour of the last valid
        # row to itself (PyTorch edge behaviour).  No-op select on full tiles.
        row0 = pl.program_id(1) * th_in
        j = jax.lax.broadcasted_iota(jnp.int32, (th_in, 1, 1), 0)
        dn = jnp.where(row0 + j + 1 >= h_in, cur, dn)
    ev_h = (0.75 * cur + 0.25 * up).astype(f32)     # even output rows (2i)
    od_h = (0.75 * cur + 0.25 * dn).astype(f32)     # odd  output rows (2i+1)

    # ---- 1x1 conv on the skip feature: ONE MXU matmul with K = 2*Cin -------
    res = res_ref[0]                                # native dtype (bf16 stays)
    th2, _, two_cin = res.shape
    conv = jnp.dot(res.reshape(th2 * w_cols, two_cin), w_ref[...],
                   preferred_element_type=f32)
    conv = conv.reshape(th_in, 2, w_cols, ev_h.shape[-1])

    # Store the two row phases straight into the (.., 2, ..) output view —
    # no interleave temporary, output last dim stays 2*Cd (=128) lane-dense.
    o_ref[0, :, 0, :, :] = (conv[:, 0] + ev_h).astype(o_ref.dtype)
    o_ref[0, :, 1, :, :] = (conv[:, 1] + od_h).astype(o_ref.dtype)


# ---------------------------------------------------------------------------
# Sizing helpers (chip-aware)
# ---------------------------------------------------------------------------
def _vmem_budgets(vmem_limit_bytes=None):
    """Consistent (tile budget, vmem_limit_bytes) pair per TPU generation."""
    cap = 64 * 1024 * 1024                       # conservative fallback
    try:
        info = pltpu.get_tpu_info()
        cap = int(getattr(info, "vmem_capacity_bytes", cap)) or cap
    except Exception:
        pass
    if vmem_limit_bytes is None:
        # half of physical: 64 MiB on v5e/v6e (128 MiB), 32 MiB on v7x (64 MiB)
        vmem_limit_bytes = cap // 2
    budget = (3 * vmem_limit_bytes) // 4          # headroom for compiler scratch
    return budget, vmem_limit_bytes


def _pick_tile_rows(h, w, cd, cin, res_isize, x_isize, out_isize, budget):
    """Largest even output-row tile TH2 (<= 2h) whose double-buffered blocks
    plus fp32 temporaries fit the budget.  TH2 need NOT divide 2h."""
    w_bytes = (2 * cin) * (2 * cd) * res_isize
    best = 2
    for th_in in range(1, h + 1):
        th2 = 2 * th_in
        res_b = th2 * w * 2 * cin * res_isize
        out_b = th2 * w * 2 * cd * out_isize
        x_b = th_in * w * cd * x_isize
        halo_b = 2 * w * cd * x_isize
        tmp_b = 12 * th_in * w * cd * 4           # fp32 temporaries, generous
        if 2 * (res_b + out_b + x_b + halo_b) + w_bytes + tmp_b <= budget:
            best = th2
    return best


def _balance_tiles(h, th2_max):
    """Split H into equal ceil-sized tiles no larger than th2_max/2 rows."""
    th_in = max(th2_max // 2, 1)
    n_th = -(-h // th_in)
    th_in = -(-h // n_th)
    return 2 * th_in, th_in, n_th


def pack_pre_conv_weight(w_io, dtype=None):
    """(Cin, Cd) 1x1-conv weight (input-major) -> (2*Cin, 2*Cd) block-diagonal
    weight for the column-paired layout.  Build once at model init to hoist
    the packing out of the per-step wrapper."""
    cin, cd = w_io.shape
    w = w_io.astype(dtype) if dtype is not None else w_io
    z = jnp.zeros((cin, cd), w.dtype)
    return jnp.concatenate([jnp.concatenate([w, z], axis=1),
                            jnp.concatenate([z, w], axis=1)], axis=0)


# ---------------------------------------------------------------------------
# Wrappers
# ---------------------------------------------------------------------------
def feature_refinement_head_nhwc(x_nhwc, res_nhwc, w_conv, *,
                                 tile_rows=None, out_dtype=None,
                                 upsample_dtype=jnp.float32,
                                 vmem_limit_bytes=None):
    """x_nhwc: (B, H, W, Cd); res_nhwc: (B, 2H, 2W, Cin);
    w_conv: (Cin, Cd) or prepacked (2*Cin, 2*Cd) from pack_pre_conv_weight.
    Returns NHWC (B, 2H, 2W, Cd).  `tile_rows` is an upper bound on the
    output-row tile; `out_dtype=jnp.bfloat16` halves output HBM traffic."""
    B, H, W, Cd = x_nhwc.shape
    Br, H2, W2, Cin = res_nhwc.shape
    assert Br == B and H2 == 2 * H and W2 == 2 * W and W >= 2
    if out_dtype is None:
        out_dtype = x_nhwc.dtype

    # Column-paired view (free row-major reshape): last dim 2*Cin (=128 for
    # the default decode_channels=64) -> full lanes on MXU and stores.
    res_pair = res_nhwc.reshape(B, H2, W, 2 * Cin)

    if w_conv.shape == (Cin, Cd):
        w_blk = pack_pre_conv_weight(w_conv, dtype=res_pair.dtype)
    elif w_conv.shape == (2 * Cin, 2 * Cd):
        w_blk = w_conv.astype(res_pair.dtype)
    else:
        raise ValueError(f"bad weight shape {w_conv.shape}")

    budget, vmem_limit = _vmem_budgets(vmem_limit_bytes)
    res_is = np.dtype(res_pair.dtype).itemsize
    x_is = np.dtype(x_nhwc.dtype).itemsize
    out_is = np.dtype(out_dtype).itemsize
    if tile_rows is None:
        th2_max = _pick_tile_rows(H, W, Cd, Cin, res_is, x_is, out_is, budget)
    else:
        assert tile_rows >= 2 and tile_rows % 2 == 0
        th2_max = min(tile_rows, 2 * H)
    th2, th_in, n_th = _balance_tiles(H, th2_max)
    tail_fix = n_th * th_in > H

    # Clamped H-halo rows (row above / below each x tile) merged into ONE
    # small array -> one tiny DMA per grid step, one wrapper gather.
    starts = np.arange(n_th) * th_in
    halo_idx = jnp.asarray(
        np.stack([np.clip(starts - 1, 0, H - 1),
                  np.clip(starts + th_in, 0, H - 1)], axis=1).astype(np.int32))
    halos = x_nhwc[:, halo_idx]                    # (B, n_th, 2, W, Cd)

    kernel = functools.partial(_frh_kernel, h_in=H, tail_fix=tail_fix,
                               ups_dtype=upsample_dtype)

    out5 = pl.pallas_call(
        kernel,
        out_shape=jax.ShapeDtypeStruct((B, H, 2, W, 2 * Cd), out_dtype),
        grid_spec=pltpu.PrefetchScalarGridSpec(
            num_scalar_prefetch=0,
            grid=(B, n_th),
            in_specs=[
                pl.BlockSpec((1, th_in, W, Cd), lambda b, t: (b, t, 0, 0)),
                pl.BlockSpec((1, 1, 2, W, Cd), lambda b, t: (b, t, 0, 0, 0)),
                pl.BlockSpec((1, th2, W, 2 * Cin), lambda b, t: (b, t, 0, 0)),
                pl.BlockSpec((2 * Cin, 2 * Cd), lambda b, t: (0, 0)),
            ],
            out_specs=pl.BlockSpec((1, th_in, 2, W, 2 * Cd),
                                   lambda b, t: (b, t, 0, 0, 0)),
        ),
        compiler_params=pltpu.CompilerParams(
            dimension_semantics=("parallel", "parallel"),
            vmem_limit_bytes=vmem_limit),
    )(x_nhwc, halos, res_pair, w_blk)

    # Free row-major un-pairing back to plain NHWC: (B,H,2,W,2Cd)->(B,2H,2W,Cd)
    return out5.reshape(B, H2, W2, Cd)


def feature_refinement_head(x_nchw, res_nchw, w_pre_conv, **kw):
    """PyTorch-parity adapter (NCHW in / NCHW out).

    x_nchw: (B, Cd, H, W); res_nchw: (B, Cin, 2H, 2W);
    w_pre_conv: (Cd, Cin, 1, 1) PyTorch 1x1-conv weight.
    In an end-to-end NHWC pipeline call feature_refinement_head_nhwc directly
    (ideally with a prepacked weight) and these transposes disappear.
    """
    x = jnp.transpose(x_nchw, (0, 2, 3, 1))              # (B, H, W, Cd)
    res = jnp.transpose(res_nchw, (0, 2, 3, 1))          # (B, 2H, 2W, Cin)
    w = jnp.transpose(w_pre_conv[:, :, 0, 0], (1, 0))    # (Cin, Cd)
    out_nhwc = feature_refinement_head_nhwc(x, res, w, **kw)
    return jnp.transpose(out_nhwc, (0, 3, 1, 2))         # (B, Cd, 2H, 2W)


# ---------------------------------------------------------------------------
# Plain-JAX reference (exact PyTorch bilinear align_corners=False matrices)
# ---------------------------------------------------------------------------
def _bilinear_matrix(out_size: int, in_size: int) -> np.ndarray:
    scale = in_size / out_size
    A = np.zeros((out_size, in_size), dtype=np.float32)
    for i in range(out_size):
        src = (i + 0.5) * scale - 0.5
        if src < 0.0:
            src = 0.0
        i0 = int(np.floor(src))
        i0 = min(i0, in_size - 1)
        i1 = min(i0 + 1, in_size - 1)
        lam = src - i0
        A[i, i0] += 1.0 - lam
        A[i, i1] += lam
    return A


def _reference(x_nchw, res_nchw, w_pre_conv):
    B, Cd, H, W = x_nchw.shape
    H2, W2 = 2 * H, 2 * W
    ah = jnp.asarray(_bilinear_matrix(H2, H))
    aw = jnp.asarray(_bilinear_matrix(W2, W))
    up = jnp.einsum('ph,bchw->bcpw', ah, x_nchw)
    up = jnp.einsum('qw,bcpw->bcpq', aw, up)
    conv = jnp.einsum('oi,bipq->bopq', w_pre_conv[:, :, 0, 0], res_nchw)
    return conv + up


# ---------------------------------------------------------------------------
if __name__ == "__main__":
    # Shapes consistent with Decoder's p1 = FeatureRefinementHead(64, 64):
    # x (decoder feature) is (B, Cd, H, W); res (skip) is (B, Cin, 2H, 2W).
    B, Cin, Cd, H, W = 2, 64, 64, 16, 16

    key = jax.random.PRNGKey(0)
    kx, kr, kw = jax.random.split(key, 3)
    x = jax.random.normal(kx, (B, Cd, H, W), dtype=jnp.float32)
    res = jax.random.normal(kr, (B, Cin, 2 * H, 2 * W), dtype=jnp.float32)
    # pre_conv: Conv2d(Cin, Cd, kernel_size=1, bias=False) -> (Cd, Cin, 1, 1)
    w_pre = jax.random.normal(kw, (Cd, Cin, 1, 1), dtype=jnp.float32) * 0.1

    ref = np.asarray(jax.block_until_ready(_reference(x, res, w_pre)))

    # 1) chip-aware auto tile size (single row tile per image at this size).
    out_auto = jax.block_until_ready(feature_refinement_head(x, res, w_pre))
    # 2) 2 row tiles per image -> exercises the merged H-halo logic.
    out_tiled = jax.block_until_ready(
        feature_refinement_head(x, res, w_pre, tile_rows=16))
    # 3) tile that does NOT divide H2 -> exercises masked tail tile + clamp.
    out_tail = jax.block_until_ready(
        feature_refinement_head(x, res, w_pre, tile_rows=12))

    for out in (out_auto, out_tiled, out_tail):
        assert out.shape == (B, Cd, 2 * H, 2 * W)
        np_out = np.asarray(out)
        assert np.allclose(np_out, ref, atol=1e-3, rtol=1e-3), (
            float(np.abs(np_out - ref).max()))

    print("KERNEL_OK")
</pallas_src>

<mosaic_0001>
module attributes {stable_mosaic.version = 11 : i64} {
  func.func @_frh_kernel(%arg0: i32, %arg1: i32, %arg2: memref<1x16x16x64xf32, #tpu.memory_space<vmem>>, %arg3: memref<1x1x2x16x64xf32, #tpu.memory_space<vmem>>, %arg4: memref<1x32x16x128xf32, #tpu.memory_space<vmem>>, %arg5: memref<128x128xf32, #tpu.memory_space<vmem>>, %arg6: memref<1x16x2x16x128xf32, #tpu.memory_space<vmem>>) attributes {dimension_semantics = [#tpu.dimension_semantics<parallel>, #tpu.dimension_semantics<parallel>], iteration_bounds = array<i64: 2, 1>, scalar_prefetch = 0 : i64, scratch_operands = 0 : i64, tpu.core_type = #tpu.core_type<tc>, window_params = [{transform_indices = @transform_0, window_bounds = array<i64: 1, 16, 16, 64>}, {transform_indices = @transform_1, window_bounds = array<i64: 1, 1, 2, 16, 64>}, {transform_indices = @transform_2, window_bounds = array<i64: 1, 32, 16, 128>}, {pipeline_mode = #tpu.pipeline_mode<synchronous>, transform_indices = @transform_3, window_bounds = array<i64: 128, 128>}, {transform_indices = @transform_4, window_bounds = array<i64: 1, 16, 2, 16, 128>}]} {
    %c0 = arith.constant 0 : index
    %c0_0 = arith.constant 0 : index
    %c0_1 = arith.constant 0 : index
    %c0_2 = arith.constant 0 : index
    %0 = vector.load %arg2[%c0, %c0_0, %c0_1, %c0_2] : memref<1x16x16x64xf32, #tpu.memory_space<vmem>>, vector<1x16x16x64xf32>
    %1 = vector.shape_cast %0 : vector<1x16x16x64xf32> to vector<16x16x64xf32>
    %c0_3 = arith.constant 0 : index
    %c0_4 = arith.constant 0 : index
    %c0_5 = arith.constant 0 : index
    %c0_6 = arith.constant 0 : index
    %c0_7 = arith.constant 0 : index
    %2 = vector.load %arg3[%c0_3, %c0_4, %c0_5, %c0_6, %c0_7] : memref<1x1x2x16x64xf32, #tpu.memory_space<vmem>>, vector<1x1x1x16x64xf32>
    %3 = vector.shape_cast %2 : vector<1x1x1x16x64xf32> to vector<16x64xf32>
    %c0_8 = arith.constant 0 : index
    %c0_9 = arith.constant 0 : index
    %c1 = arith.constant 1 : index
    %c0_10 = arith.constant 0 : index
    %c0_11 = arith.constant 0 : index
    %4 = vector.load %arg3[%c0_8, %c0_9, %c1, %c0_10, %c0_11] : memref<1x1x2x16x64xf32, #tpu.memory_space<vmem>>, vector<1x1x1x16x64xf32>
    %5 = vector.shape_cast %4 : vector<1x1x1x16x64xf32> to vector<16x64xf32>
    %6 = vector.shape_cast %3 : vector<16x64xf32> to vector<1x16x64xf32>
    %7 = vector.shape_cast %5 : vector<16x64xf32> to vector<1x16x64xf32>
    %8 = tpu.concatenate %6, %1, %7 in 0 : vector<1x16x64xf32>, vector<16x16x64xf32>, vector<1x16x64xf32> -> vector<18x16x64xf32>
    %9 = vector.extract_strided_slice %8 {offsets = [0, 0, 0], sizes = [18, 1, 64], strides = [1, 1, 1]} : vector<18x16x64xf32> to vector<18x1x64xf32>
    %10 = vector.extract_strided_slice %8 {offsets = [0, 0, 0], sizes = [18, 15, 64], strides = [1, 1, 1]} : vector<18x16x64xf32> to vector<18x15x64xf32>
    %11 = tpu.concatenate %9, %10 in 1 : vector<18x1x64xf32>, vector<18x15x64xf32> -> vector<18x16x64xf32>
    %12 = vector.extract_strided_slice %8 {offsets = [0, 1, 0], sizes = [18, 15, 64], strides = [1, 1, 1]} : vector<18x16x64xf32> to vector<18x15x64xf32>
    %13 = vector.extract_strided_slice %8 {offsets = [0, 15, 0], sizes = [18, 1, 64], strides = [1, 1, 1]} : vector<18x16x64xf32> to vector<18x1x64xf32>
    %14 = tpu.concatenate %12, %13 in 1 : vector<18x15x64xf32>, vector<18x1x64xf32> -> vector<18x16x64xf32>
    %cst = arith.constant 7.500000e-01 : f32
    %15 = vector.broadcast %cst : f32 to vector<18x16x64xf32>
    %16 = arith.mulf %15, %8 : vector<18x16x64xf32>
    %cst_12 = arith.constant 2.500000e-01 : f32
    %17 = vector.broadcast %cst_12 : f32 to vector<18x16x64xf32>
    %18 = arith.mulf %17, %11 : vector<18x16x64xf32>
    %19 = arith.addf %16, %18 : vector<18x16x64xf32>
    %cst_13 = arith.constant 7.500000e-01 : f32
    %20 = vector.broadcast %cst_13 : f32 to vector<18x16x64xf32>
    %21 = arith.mulf %20, %8 : vector<18x16x64xf32>
    %cst_14 = arith.constant 2.500000e-01 : f32
    %22 = vector.broadcast %cst_14 : f32 to vector<18x16x64xf32>
    %23 = arith.mulf %22, %14 : vector<18x16x64xf32>
    %24 = arith.addf %21, %23 : vector<18x16x64xf32>
    %25 = tpu.concatenate %19, %24 in 2 : vector<18x16x64xf32>, vector<18x16x64xf32> -> vector<18x16x128xf32>
    %26 = vector.extract_strided_slice %25 {offsets = [1, 0, 0], sizes = [16, 16, 128], strides = [1, 1, 1]} : vector<18x16x128xf32> to vector<16x16x128xf32>
    %27 = vector.extract_strided_slice %25 {offsets = [0, 0, 0], sizes = [16, 16, 128], strides = [1, 1, 1]} : vector<18x16x128xf32> to vector<16x16x128xf32>
    %28 = vector.extract_strided_slice %25 {offsets = [2, 0, 0], sizes = [16, 16, 128], strides = [1, 1, 1]} : vector<18x16x128xf32> to vector<16x16x128xf32>
    %cst_15 = arith.constant 7.500000e-01 : f32
    %29 = vector.broadcast %cst_15 : f32 to vector<16x16x128xf32>
    %30 = arith.mulf %29, %26 : vector<16x16x128xf32>
    %cst_16 = arith.constant 2.500000e-01 : f32
    %31 = vector.broadcast %cst_16 : f32 to vector<16x16x128xf32>
    %32 = arith.mulf %31, %27 : vector<16x16x128xf32>
    %33 = arith.addf %30, %32 : vector<16x16x128xf32>
    %cst_17 = arith.constant 7.500000e-01 : f32
    %34 = vector.broadcast %cst_17 : f32 to vector<16x16x128xf32>
    %35 = arith.mulf %34, %26 : vector<16x16x128xf32>
    %cst_18 = arith.constant 2.500000e-01 : f32
    %36 = vector.broadcast %cst_18 : f32 to vector<16x16x128xf32>
    %37 = arith.mulf %36, %28 : vector<16x16x128xf32>
    %38 = arith.addf %35, %37 : vector<16x16x128xf32>
    %c0_19 = arith.constant 0 : index
    %c0_20 = arith.constant 0 : index
    %c0_21 = arith.constant 0 : index
    %c0_22 = arith.constant 0 : index
    %39 = vector.load %arg4[%c0_19, %c0_20, %c0_21, %c0_22] : memref<1x32x16x128xf32, #tpu.memory_space<vmem>>, vector<1x32x16x128xf32>
    %40 = vector.shape_cast %39 : vector<1x32x16x128xf32> to vector<32x16x128xf32>
    %41 = vector.shape_cast %40 : vector<32x16x128xf32> to vector<512x128xf32>
    %c0_23 = arith.constant 0 : index
    %c0_24 = arith.constant 0 : index
    %42 = vector.load %arg5[%c0_23, %c0_24] : memref<128x128xf32, #tpu.memory_space<vmem>>, vector<128x128xf32>
    %cst_25 = arith.constant dense<0.000000e+00> : vector<512x128xf32>
    %43 = tpu.matmul %41, %42, %cst_25 {dimension_numbers = #tpu.dot_dimension_numbers<[1], [0], [0], [1], [0, 0, 1, 1], [], []>} : vector<512x128xf32>, vector<128x128xf32>, vector<512x128xf32> -> vector<512x128xf32>
    %44 = vector.shape_cast %43 : vector<512x128xf32> to vector<16x2x16x128xf32>
    %45 = vector.extract_strided_slice %44 {offsets = [0, 0, 0, 0], sizes = [16, 1, 16, 128], strides = [1, 1, 1, 1]} : vector<16x2x16x128xf32> to vector<16x1x16x128xf32>
    %46 = vector.shape_cast %45 : vector<16x1x16x128xf32> to vector<16x16x128xf32>
    %47 = arith.addf %46, %33 : vector<16x16x128xf32>
    %c0_26 = arith.constant 0 : index
    %c0_27 = arith.constant 0 : index
    %c0_28 = arith.constant 0 : index
    %c0_29 = arith.constant 0 : index
    %c0_30 = arith.constant 0 : index
    %48 = vector.load %arg6[%c0_26, %c0_27, %c0_28, %c0_29, %c0_30] : memref<1x16x2x16x128xf32, #tpu.memory_space<vmem>>, vector<1x16x1x16x128xf32>
    %49 = vector.shape_cast %48 : vector<1x16x1x16x128xf32> to vector<16x16x128xf32>
    %50 = vector.shape_cast %47 : vector<16x16x128xf32> to vector<1x16x1x16x128xf32>
    tpu.vector_store %arg6[%c0_26, %c0_27, %c0_28, %c0_29, %c0_30], %50 {strides = array<i32>} : memref<1x16x2x16x128xf32, #tpu.memory_space<vmem>>, vector<1x16x1x16x128xf32>,
    %51 = vector.extract_strided_slice %44 {offsets = [0, 1, 0, 0], sizes = [16, 1, 16, 128], strides = [1, 1, 1, 1]} : vector<16x2x16x128xf32> to vector<16x1x16x128xf32>
    %52 = vector.shape_cast %51 : vector<16x1x16x128xf32> to vector<16x16x128xf32>
    %53 = arith.addf %52, %38 : vector<16x16x128xf32>
    %c0_31 = arith.constant 0 : index
    %c0_32 = arith.constant 0 : index
    %c1_33 = arith.constant 1 : index
    %c0_34 = arith.constant 0 : index
    %c0_35 = arith.constant 0 : index
    %54 = vector.load %arg6[%c0_31, %c0_32, %c1_33, %c0_34, %c0_35] : memref<1x16x2x16x128xf32, #tpu.memory_space<vmem>>, vector<1x16x1x16x128xf32>
    %55 = vector.shape_cast %54 : vector<1x16x1x16x128xf32> to vector<16x16x128xf32>
    %56 = vector.shape_cast %53 : vector<16x16x128xf32> to vector<1x16x1x16x128xf32>
    tpu.vector_store %arg6[%c0_31, %c0_32, %c1_33, %c0_34, %c0_35], %56 {strides = array<i32>} : memref<1x16x2x16x128xf32, #tpu.memory_space<vmem>>, vector<1x16x1x16x128xf32>,
    return
  }
  func.func @transform_0(%arg0: i32, %arg1: i32) -> (i32, i32, i32, i32) {
    %c0_i32 = arith.constant 0 : i32
    %c0_i32_0 = arith.constant 0 : i32
    %c0_i32_1 = arith.constant 0 : i32
    return %arg0, %arg1, %c0_i32, %c0_i32_0 : i32, i32, i32, i32
  }
  func.func @transform_1(%arg0: i32, %arg1: i32) -> (i32, i32, i32, i32, i32) {
    %c0_i32 = arith.constant 0 : i32
    %c0_i32_0 = arith.constant 0 : i32
    %c0_i32_1 = arith.constant 0 : i32
    %c0_i32_2 = arith.constant 0 : i32
    return %arg0, %arg1, %c0_i32, %c0_i32_0, %c0_i32_1 : i32, i32, i32, i32, i32
  }
  func.func @transform_2(%arg0: i32, %arg1: i32) -> (i32, i32, i32, i32) {
    %c0_i32 = arith.constant 0 : i32
    %c0_i32_0 = arith.constant 0 : i32
    %c0_i32_1 = arith.constant 0 : i32
    return %arg0, %arg1, %c0_i32, %c0_i32_0 : i32, i32, i32, i32
  }
  func.func @transform_3(%arg0: i32, %arg1: i32) -> (i32, i32) {
    %c0_i32 = arith.constant 0 : i32
    %c0_i32_0 = arith.constant 0 : i32
    %c0_i32_1 = arith.constant 0 : i32
    return %c0_i32, %c0_i32_0 : i32, i32
  }
  func.func @transform_4(%arg0: i32, %arg1: i32) -> (i32, i32, i32, i32, i32) {
    %c0_i32 = arith.constant 0 : i32
    %c0_i32_0 = arith.constant 0 : i32
    %c0_i32_1 = arith.constant 0 : i32
    %c0_i32_2 = arith.constant 0 : i32
    return %arg0, %arg1, %c0_i32, %c0_i32_0, %c0_i32_1 : i32, i32, i32, i32, i32
  }
}

</mosaic_0001>

<llo_original>
// kernel: tpu_custom_call.1
$region0: #{tpu_custom_call.1}
  #allocation0 [shape = 'u32[]', space=smem, size = 0x4, offset = 0x4, fixed_abs, tag = 'smem constant byte address 0x4 - core index']
  #allocation1 [shape = 'u32[72,128]{1,0:T(1,128)}', space=vmem, size = 0x9000, scoped, tag = 'internal scratch']
  %s0 = inlined_call_operand.hbm [shape: f32[2,16,16,64], index: 0, kind: input, shape index: {}]
  %s1 = inlined_call_operand.hbm [shape: f32[2,1,2,16,64], index: 1, kind: input, shape index: {}]
  %s2 = inlined_call_operand.hbm [shape: f32[2,32,16,128], index: 2, kind: input, shape index: {}]
  %s3 = inlined_call_operand.hbm [shape: f32[128,128], index: 3, kind: input, shape index: {}]
  %s4 = inlined_call_operand.hbm [shape: f32[2,16,2,16,128], index: 4, kind: output, shape index: {}]
  %s5 = sld [smem:[#allocation0]]
  $region65: #{tpu_custom_call.1} parent=0
    _
  %s7 = ssub.s32 1, %s5
  %s8 = scalar_select 0, %s7, %s5
  $region1: #{tpu_custom_call.1} parent=0
    #allocation2 [shape = 'u8[262144]{0}', space=vmem, size = 0x40000, scoped, tag = 'input window, operand 0']
    #allocation3 [shape = 's32[2]{0}', space=sflag, size = 0x8, scoped, tag = 'scoped memory for tpu_custom_call.1']
    #allocation4 [shape = 's32[2]{0}', space=sflag, size = 0x8, scoped, tag = 'scoped memory for tpu_custom_call.1']
    #allocation5 [shape = 'u8[32768]{0}', space=vmem, size = 0x8000, scoped, tag = 'input window, operand 1']
    #allocation6 [shape = 's32[2]{0}', space=sflag, size = 0x8, scoped, tag = 'scoped memory for tpu_custom_call.1']
    #allocation7 [shape = 'u8[524288]{0}', space=vmem, size = 0x80000, scoped, tag = 'input window, operand 2']
    #allocation8 [shape = 'u8[65536]{0}', space=vmem, size = 0x10000, scoped, tag = 'input window, operand 3, single buffered']
    #allocation9 [shape = 's32[1]{0}', space=sflag, size = 0x4, scoped, tag = 'scoped memory for tpu_custom_call.1']
    #allocation10 [shape = 'u8[524288]{0}', space=vmem, size = 0x80000, scoped, tag = 'output window, operand 0']
    %9 = vsyncpa [#allocation3], 0
    %s10 = scalar_lea.sflag [#allocation3], 1
    %11 = vsyncpa %s10, 0
    %12 = vsyncpa [#allocation6], 0
    %s13 = scalar_lea.sflag [#allocation6], 1
    %14 = vsyncpa %s13, 0
    %15 = vsyncpa [#allocation9], 0
    %16 = vsyncpa [#allocation4], 0
    %s17 = scalar_lea.sflag [#allocation4], 1
    %18 = vsyncpa %s17, 0
    loop: start=0, step=1, limit=4
    $region2: #{tpu_custom_call.1} parent=1 // loop_pre_header
      _
    $region3: #{tpu_custom_call.1} parent=1 // loop_header
      %s20 = sphi 0, %s24
      %p21 = scmp.ge.s32.totalorder %s20, 4
      %s27 = sphi 0, %s39
      %s28 = sphi 0, %s35
      %s29 = sphi 0, %s27
      %s30 = sphi 0, %s28
      %s31 = sphi 0, %s29
      %s32 = sphi 0, %s30
      %s44 = sphi 0, %s46
      %s47 = sphi 0, %s44
      %s48 = sphi 0, %s47
      %s64 = sphi 0, %s48
      %s72 = sphi 0, %s74
      %s75 = sphi 0, %s72
      %s76 = sphi 0, %s75
      %s92 = sphi 0, %s76
      %s100 = sphi 0, %s102
      %s103 = sphi 0, %s100
      %s104 = sphi 0, %s103
      %s120 = sphi 0, %s104
      %s124 = sphi 0, %s124
      %s126 = sphi 0, %s124
      %s127 = sphi 0, %s126
      %s141 = sphi 0, %s127
      %s149 = sphi 0, %s151
      %s152 = sphi 0, %s149
      %s153 = sphi 0, %s152
      %s169 = sphi 0, %s153
    $region4: #{tpu_custom_call.1} parent=1 // loop_header_branch
      %23 = sbr.rel (%p21) target = $region8
    $region5: #{tpu_custom_call.1} parent=1 // loop_body
      %s25 = ssub.s32 %s20, 1
      %s26 = ssub.s32 %s20, 2
      %s33 = sadd.s32 1, %s28
      %p34 = scmp.ge.s32.totalorder %s33, 1
      %s35 = scalar_select %p34, 0, %s33
      %s36 = sadd.s32 1, %s27
      %s37 = scalar_select %p34, %s36, %s27
      %p38 = scmp.ge.s32.totalorder %s37, 2
      %s39 = scalar_select %p38, 0, %s37
      %s40 = ssub.s32 %s27, %s39
      %s41 = ssub.s32 %s28, %s35
      %s42 = sor.u32 %s40, %s41
      %p43 = scmp.eq.s32.totalorder %s42, 0
      %s45 = sadd.s32 %s44, 1
      %s46 = scalar_select %p43, %s44, %s45
      %p49 = pneg %p43
      %p50 = scmp.eq.s32.totalorder %s20, 1
      %p51 = por %p49, %p50
      %p52 = scmp.ne.s32.totalorder %s44, %s47
      %p53 = scmp.eq.s32.totalorder %s20, 0
      %p54 = por %p52, %p53
      %p55 = scmp.ne.s32.totalorder %s44, %s47
      %p56 = scmp.eq.s32.totalorder %s25, 1
      %p57 = por %p55, %p56
      %p58 = scmp.ne.s32.totalorder %s47, %s48
      %p59 = scmp.eq.s32.totalorder %s25, 0
      %p60 = por %p58, %p59
      %p61 = scmp.ne.s32.totalorder %s47, %s48
      %p62 = scmp.eq.s32.totalorder %s26, 1
      %p63 = por %p61, %p62
      %p65 = scmp.ne.s32.totalorder %s48, %s64
      %p66 = scmp.eq.s32.totalorder %s26, 0
      %p67 = por %p65, %p66
      %s68 = ssub.s32 %s27, %s39
      %s69 = ssub.s32 %s28, %s35
      %s70 = sor.u32 %s68, %s69
      %p71 = scmp.eq.s32.totalorder %s70, 0
      %s73 = sadd.s32 %s72, 1
      %s74 = scalar_select %p71, %s72, %s73
      %p77 = pneg %p71
      %p78 = scmp.eq.s32.totalorder %s20, 1
      %p79 = por %p77, %p78
      %p80 = scmp.ne.s32.totalorder %s72, %s75
      %p81 = scmp.eq.s32.totalorder %s20, 0
      %p82 = por %p80, %p81
      %p83 = scmp.ne.s32.totalorder %s72, %s75
      %p84 = scmp.eq.s32.totalorder %s25, 1
      %p85 = por %p83, %p84
      %p86 = scmp.ne.s32.totalorder %s75, %s76
      %p87 = scmp.eq.s32.totalorder %s25, 0
      %p88 = por %p86, %p87
      %p89 = scmp.ne.s32.totalorder %s75, %s76
      %p90 = scmp.eq.s32.totalorder %s26, 1
      %p91 = por %p89, %p90
      %p93 = scmp.ne.s32.totalorder %s76, %s92
      %p94 = scmp.eq.s32.totalorder %s26, 0
      %p95 = por %p93, %p94
      %s96 = ssub.s32 %s27, %s39
      %s97 = ssub.s32 %s28, %s35
      %s98 = sor.u32 %s96, %s97
      %p99 = scmp.eq.s32.totalorder %s98, 0
      %s101 = sadd.s32 %s100, 1
      %s102 = scalar_select %p99, %s100, %s101
      %p105 = pneg %p99
      %p106 = scmp.eq.s32.totalorder %s20, 1
      %p107 = por %p105, %p106
      %p108 = scmp.ne.s32.totalorder %s100, %s103
      %p109 = scmp.eq.s32.totalorder %s20, 0
      %p110 = por %p108, %p109
      %p111 = scmp.ne.s32.totalorder %s100, %s103
      %p112 = scmp.eq.s32.totalorder %s25, 1
      %p113 = por %p111, %p112
      %p114 = scmp.ne.s32.totalorder %s103, %s104
      %p115 = scmp.eq.s32.totalorder %s25, 0
      %p116 = por %p114, %p115
      %p117 = scmp.ne.s32.totalorder %s103, %s104
      %p118 = scmp.eq.s32.totalorder %s26, 1
      %p119 = por %p117, %p118
      %p121 = scmp.ne.s32.totalorder %s104, %s120
      %p122 = scmp.eq.s32.totalorder %s26, 0
      %p123 = por %p121, %p122
      %s125 = sadd.s32 %s124, 1
      %p128 = scmp.eq.s32.totalorder %s20, 1
      %p129 = scmp.ne.s32.totalorder %s124, %s126
      %p130 = scmp.eq.s32.totalorder %s20, 0
      %p131 = por %p129, %p130
      %p132 = scmp.ne.s32.totalorder %s124, %s126
      %p133 = scmp.eq.s32.totalorder %s25, 1
      %p134 = por %p132, %p133
      %p135 = scmp.ne.s32.totalorder %s126, %s127
      %p136 = scmp.eq.s32.totalorder %s25, 0
      %p137 = por %p135, %p136
      %p138 = scmp.ne.s32.totalorder %s126, %s127
      %p139 = scmp.eq.s32.totalorder %s26, 1
      %p140 = por %p138, %p139
      %p142 = scmp.ne.s32.totalorder %s127, %s141
      %p143 = scmp.eq.s32.totalorder %s26, 0
      %p144 = por %p142, %p143
      %s145 = ssub.s32 %s27, %s39
      %s146 = ssub.s32 %s28, %s35
      %s147 = sor.u32 %s145, %s146
      %p148 = scmp.eq.s32.totalorder %s147, 0
      %s150 = sadd.s32 %s149, 1
      %s151 = scalar_select %p148, %s149, %s150
      %p154 = pneg %p148
      %p155 = scmp.eq.s32.totalorder %s20, 1
      %p156 = por %p154, %p155
      %p157 = scmp.ne.s32.totalorder %s149, %s152
      %p158 = scmp.eq.s32.totalorder %s20, 0
      %p159 = por %p157, %p158
      %p160 = scmp.ne.s32.totalorder %s149, %s152
      %p161 = scmp.eq.s32.totalorder %s25, 1
      %p162 = por %p160, %p161
      %p163 = scmp.ne.s32.totalorder %s152, %s153
      %p164 = scmp.eq.s32.totalorder %s25, 0
      %p165 = por %p163, %p164
      %p166 = scmp.ne.s32.totalorder %s152, %s153
      %p167 = scmp.eq.s32.totalorder %s26, 1
      %p168 = por %p166, %p167
      %p170 = scmp.ne.s32.totalorder %s153, %s169
      %p171 = scmp.eq.s32.totalorder %s26, 0
      %p172 = por %p170, %p171
      %p173 = scmp.le.s32.totalorder 1, %s20
      %p174 = scmp.lt.s32.totalorder %s20, 3
      %p175 = pnand %p173, %p174
      %p176 = pneg %p175
      // Predicated region
      $region9: #{tpu_custom_call.1} parent=5 // pred_check
        _
      $region10: #{tpu_custom_call.1} parent=5 // pred_check_branch
        %178 = sbr.rel (%p175) target = $region12
      $region11: #{tpu_custom_call.1} parent=5 // pred_region
        %s179 = ssub.s32 %s20, 1
        // Predicated region
        $region13: #{tpu_custom_call.1} parent=11 // pred_check
          %p180 = pneg %p137
        $region14: #{tpu_custom_call.1} parent=11 // pred_check_branch
          %182 = sbr.rel (%p180) target = $region16
        $region15: #{tpu_custom_call.1} parent=11 // pred_region
          %184 = vsyncadd [#allocation9], 0
          %s185 = sshll.u32 %s3, 4
          %s186 = int_to_ptr.hbm [resolvable:$true] %s185
          %s187 = sshll.u32 [#allocation8], 4
          %s188 = int_to_ptr.vmem [resolvable:$true] %s187
          %193 = dma.hbm_to_vmem [thread:$0]  %s186, 2048, %s188, [#allocation9], 128, 128, 8
        $region16: #{tpu_custom_call.1} parent=11 // pred_fallthru
          _
      $region12: #{tpu_custom_call.1} parent=5 // pred_fallthru
        _
      %p194 = scmp.lt.s32.totalorder %s20, 2
      // Predicated region
      $region17: #{tpu_custom_call.1} parent=5 // pred_check
        %p195 = pneg %p194
      $region18: #{tpu_custom_call.1} parent=5 // pred_check_branch
        %197 = sbr.rel (%p195) target = $region20
      $region19: #{tpu_custom_call.1} parent=5 // pred_region
        // Predicated region
        $region21: #{tpu_custom_call.1} parent=19 // pred_check
          %p198 = pneg %p54
        $region22: #{tpu_custom_call.1} parent=19 // pred_check_branch
          %200 = sbr.rel (%p198) target = $region24
        $region23: #{tpu_custom_call.1} parent=19 // pred_region
          %s201 = sand.u32 %s44, 1
          %s202 = scalar_lea.sflag [#allocation3], %s201
          %s203 = sand.u32 %s44, 1
          %s204 = smul.addr %s203, 256
          %s205 = scalar_lea.vmem [#allocation2], %s204
          %s206 = smul.u32 16, %s28
          %208 = vsyncadd %s202, 0
          %s209 = smul.addr %s206, 2
          %s210 = smul.addr %s27, 32
          %s211 = sadd.s32 %s209, %s210
          %s212 = smul.addr %s211, 8
          %s213 = scalar_lea.hbm %s0, %s212
          %s214 = sshll.u32 %s213, 4
          %s215 = int_to_ptr.hbm [resolvable:$true] %s214
          %s216 = sshll.u32 %s205, 4
          %s217 = int_to_ptr.vmem [resolvable:$true] %s216
          %222 = dma.hbm_to_vmem [thread:$0]  %s215, 4096, %s217, %s202, 128, 128, 8
        $region24: #{tpu_custom_call.1} parent=19 // pred_fallthru
          _
        // Predicated region
        $region25: #{tpu_custom_call.1} parent=19 // pred_check
          %p223 = pneg %p82
        $region26: #{tpu_custom_call.1} parent=19 // pred_check_branch
          %225 = sbr.rel (%p223) target = $region28
        $region27: #{tpu_custom_call.1} parent=19 // pred_region
          %s226 = sand.u32 %s20, 1
          %s227 = scalar_lea.sflag [#allocation6], %s226
          %s228 = sand.u32 %s72, 1
          %s229 = smul.addr %s228, 32
          %s230 = scalar_lea.vmem [#allocation5], %s229
          %232 = vsyncadd %s227, 0
          %s233 = smul.addr %s28, 4
          %s234 = smul.addr %s27, 4
          %s235 = sadd.s32 %s233, %s234
          %s236 = smul.addr %s235, 8
          %s237 = scalar_lea.hbm %s1, %s236
          %s238 = sshll.u32 %s237, 4
          %s239 = int_to_ptr.hbm [resolvable:$true] %s238
          %s240 = sshll.u32 %s230, 4
          %s241 = int_to_ptr.vmem [resolvable:$true] %s240
          %246 = dma.hbm_to_vmem [thread:$0]  %s239, 512, %s241, %s227, 128, 128, 8
        $region28: #{tpu_custom_call.1} parent=19 // pred_fallthru
          _
        // Predicated region
        $region29: #{tpu_custom_call.1} parent=19 // pred_check
          %p247 = pneg %p110
        $region30: #{tpu_custom_call.1} parent=19 // pred_check_branch
          %249 = sbr.rel (%p247) target = $region32
        $region31: #{tpu_custom_call.1} parent=19 // pred_region
          %s250 = sand.u32 %s20, 1
          %s251 = scalar_lea.sflag [#allocation6], %s250
          %s252 = sand.u32 %s100, 1
          %s253 = smul.addr %s252, 512
          %s254 = scalar_lea.vmem [#allocation7], %s253
          %s255 = smul.u32 32, %s28
          %257 = vsyncadd %s251, 0
          %s258 = smul.addr %s255, 2
          %s259 = smul.addr %s27, 64
          %s260 = sadd.s32 %s258, %s259
          %s261 = smul.addr %s260, 8
          %s262 = scalar_lea.hbm %s2, %s261
          %s263 = sshll.u32 %s262, 4
          %s264 = int_to_ptr.hbm [resolvable:$true] %s263
          %s265 = sshll.u32 %s254, 4
          %s266 = int_to_ptr.vmem [resolvable:$true] %s265
          %271 = dma.hbm_to_vmem [thread:$0]  %s264, 8192, %s266, %s251, 128, 128, 8
        $region32: #{tpu_custom_call.1} parent=19 // pred_fallthru
          _
      $region20: #{tpu_custom_call.1} parent=5 // pred_fallthru
        _
      %p272 = scmp.le.s32.totalorder 1, %s20
      %p273 = scmp.lt.s32.totalorder %s20, 3
      %p274 = pnand %p272, %p273
      %p275 = pneg %p274
      // Predicated region
      $region33: #{tpu_custom_call.1} parent=5 // pred_check
        _
      $region34: #{tpu_custom_call.1} parent=5 // pred_check_branch
        %277 = sbr.rel (%p274) target = $region36
      $region35: #{tpu_custom_call.1} parent=5 // pred_region
        %s278 = ssub.s32 %s20, 1
        %s279 = sand.u32 %s47, 1
        %s280 = scalar_lea.sflag [#allocation3], %s279
        %s281 = sand.u32 %s47, 1
        %s282 = smul.addr %s281, 256
        %s283 = scalar_lea.vmem [#allocation2], %s282
        // Predicated region
        $region37: #{tpu_custom_call.1} parent=35 // pred_check
          %p284 = pneg %p60
        $region38: #{tpu_custom_call.1} parent=35 // pred_check_branch
          %286 = sbr.rel (%p284) target = $region40
        $region39: #{tpu_custom_call.1} parent=35 // pred_region
          %288 = dma.done %s280, 4096
        $region40: #{tpu_custom_call.1} parent=35 // pred_fallthru
          _
        %s289 = sand.u32 %s25, 1
        %s290 = scalar_lea.sflag [#allocation6], %s289
        %s291 = sand.u32 %s75, 1
        %s292 = smul.addr %s291, 32
        %s293 = scalar_lea.vmem [#allocation5], %s292
        // Predicated region
        $region41: #{tpu_custom_call.1} parent=35 // pred_check
          %p294 = pneg %p88
        $region42: #{tpu_custom_call.1} parent=35 // pred_check_branch
          %296 = sbr.rel (%p294) target = $region44
        $region43: #{tpu_custom_call.1} parent=35 // pred_region
          %298 = dma.done %s290, 512
        $region44: #{tpu_custom_call.1} parent=35 // pred_fallthru
          _
        %s299 = sand.u32 %s25, 1
        %s300 = scalar_lea.sflag [#allocation6], %s299
        %s301 = sand.u32 %s103, 1
        %s302 = smul.addr %s301, 512
        %s303 = scalar_lea.vmem [#allocation7], %s302
        // Predicated region
        $region45: #{tpu_custom_call.1} parent=35 // pred_check
          %p304 = pneg %p116
        $region46: #{tpu_custom_call.1} parent=35 // pred_check_branch
          %306 = sbr.rel (%p304) target = $region48
        $region47: #{tpu_custom_call.1} parent=35 // pred_region
          %308 = dma.done %s300, 8192
        $region48: #{tpu_custom_call.1} parent=35 // pred_fallthru
          _
        // Predicated region
        $region49: #{tpu_custom_call.1} parent=35 // pred_check
          %p309 = pneg %p137
        $region50: #{tpu_custom_call.1} parent=35 // pred_check_branch
          %311 = sbr.rel (%p309) target = $region52
        $region51: #{tpu_custom_call.1} parent=35 // pred_region
          %313 = dma.done [#allocation9], 2048
        $region52: #{tpu_custom_call.1} parent=35 // pred_fallthru
          _
        %s314 = sand.u32 %s47, 1
        %s315 = scalar_lea.sflag [#allocation3], %s314
        %s316 = sand.u32 %s47, 1
        %s317 = smul.addr %s316, 256
        %s318 = scalar_lea.vmem [#allocation2], %s317
        %p319 = pneg %p60
        %p320 = pneg %p57
        %s321 = sand.u32 %s25, 1
        %s322 = scalar_lea.sflag [#allocation6], %s321
        %s323 = sand.u32 %s75, 1
        %s324 = smul.addr %s323, 32
        %s325 = scalar_lea.vmem [#allocation5], %s324
        %p326 = pneg %p88
        %p327 = pneg %p85
        %s328 = sand.u32 %s25, 1
        %s329 = scalar_lea.sflag [#allocation6], %s328
        %s330 = sand.u32 %s103, 1
        %s331 = smul.addr %s330, 512
        %s332 = scalar_lea.vmem [#allocation7], %s331
        %p333 = pneg %p116
        %p334 = pneg %p113
        %p335 = pneg %p137
        %p336 = pneg %p134
        %p337 = pneg %p165
        %p338 = pneg %p162
        %s339 = sand.u32 %s152, 1
        %s340 = scalar_lea.sflag [#allocation4], %s339
        %s341 = sand.u32 %s152, 1
        %s342 = smul.addr %s341, 512
        %s343 = scalar_lea.vmem [#allocation10], %s342
        %s344 = smul.u32 16, %s30
        %s345 = smul.u32 32, %s30
        %s346 = smul.u32 16, %s30
        %v347 = vld [vmem:[%s283] sm:$0xff]
        %v348 = vld [vmem:[%s283 + $0x8] sm:$0xff]
        %v349 = vld [vmem:[%s283 + $0x10] sm:$0xff]
        %v350 = vld [vmem:[%s283 + $0x18] sm:$0xff]
        %v351 = vld [vmem:[%s283 + $0x20] sm:$0xff]
        %v352 = vld [vmem:[%s283 + $0x28] sm:$0xff]
        %v353 = vld [vmem:[%s283 + $0x30] sm:$0xff]
        %v354 = vld [vmem:[%s283 + $0x38] sm:$0xff]
        %v355 = vld [vmem:[%s283 + $0x40] sm:$0xff]
        %v356 = vld [vmem:[%s283 + $0x48] sm:$0xff]
        %v357 = vld [vmem:[%s283 + $0x50] sm:$0xff]
        %v358 = vld [vmem:[%s283 + $0x58] sm:$0xff]
        %v359 = vld [vmem:[%s283 + $0x60] sm:$0xff]
        %v360 = vld [vmem:[%s283 + $0x68] sm:$0xff]
        %v361 = vld [vmem:[%s283 + $0x70] sm:$0xff]
        %v362 = vld [vmem:[%s283 + $0x78] sm:$0xff]
        %v363 = vld [vmem:[%s283 + $0x80] sm:$0xff]
        %v364 = vld [vmem:[%s283 + $0x88] sm:$0xff]
        %v365 = vld [vmem:[%s283 + $0x90] sm:$0xff]
        %v366 = vld [vmem:[%s283 + $0x98] sm:$0xff]
        %v367 = vld [vmem:[%s283 + $0xa0] sm:$0xff]
        %v368 = vld [vmem:[%s283 + $0xa8] sm:$0xff]
        %v369 = vld [vmem:[%s283 + $0xb0] sm:$0xff]
        %v370 = vld [vmem:[%s283 + $0xb8] sm:$0xff]
        %v371 = vld [vmem:[%s283 + $0xc0] sm:$0xff]
        %v372 = vld [vmem:[%s283 + $0xc8] sm:$0xff]
        %v373 = vld [vmem:[%s283 + $0xd0] sm:$0xff]
        %v374 = vld [vmem:[%s283 + $0xd8] sm:$0xff]
        %v375 = vld [vmem:[%s283 + $0xe0] sm:$0xff]
        %v376 = vld [vmem:[%s283 + $0xe8] sm:$0xff]
        %v377 = vld [vmem:[%s283 + $0xf0] sm:$0xff]
        %v378 = vld [vmem:[%s283 + $0xf8] sm:$0xff]
        %v379 = vld [vmem:[%s293] sm:$0xff]
        %v380 = vld [vmem:[%s293 + $0x8] sm:$0xff]
        %s381 = scalar_lea.vmem %s293, 16 [#allocation5]
        %v382 = vld [vmem:[%s381] sm:$0xff]
        %v383 = vld [vmem:[%s381 + $0x8] sm:$0xff]
        %vm420 = vcmask 1040384
        %v421 = vrot.slane %v379, 7
        %v422 = vrot.slane %v380, 7
        %v423 = vsel %vm420, %v421, %v422
        %v424 = vrot.slane %v347, 7
        %v425 = vrot.slane %v348, 7
        %v426 = vsel %vm420, %v424, %v425
        %v427 = vrot.slane %v349, 7
        %v428 = vrot.slane %v350, 7
        %v429 = vsel %vm420, %v427, %v428
        %v430 = vrot.slane %v351, 7
        %v431 = vrot.slane %v352, 7
        %v432 = vsel %vm420, %v430, %v431
        %v433 = vrot.slane %v353, 7
        %v434 = vrot.slane %v354, 7
        %v435 = vsel %vm420, %v433, %v434
        %v436 = vrot.slane %v355, 7
        %v437 = vrot.slane %v356, 7
        %v438 = vsel %vm420, %v436, %v437
        %v439 = vrot.slane %v357, 7
        %v440 = vrot.slane %v358, 7
        %v441 = vsel %vm420, %v439, %v440
        %v442 = vrot.slane %v359, 7
        %v443 = vrot.slane %v360, 7
        %v444 = vsel %vm420, %v442, %v443
        %v445 = vrot.slane %v361, 7
        %v446 = vrot.slane %v362, 7
        %v447 = vsel %vm420, %v445, %v446
        %v448 = vrot.slane %v363, 7
        %v449 = vrot.slane %v364, 7
        %v450 = vsel %vm420, %v448, %v449
        %v451 = vrot.slane %v365, 7
        %v452 = vrot.slane %v366, 7
        %v453 = vsel %vm420, %v451, %v452
        %v454 = vrot.slane %v367, 7
        %v455 = vrot.slane %v368, 7
        %v456 = vsel %vm420, %v454, %v455
        %v457 = vrot.slane %v369, 7
        %v458 = vrot.slane %v370, 7
        %v459 = vsel %vm420, %v457, %v458
        %v460 = vrot.slane %v371, 7
        %v461 = vrot.slane %v372, 7
        %v462 = vsel %vm420, %v460, %v461
        %v463 = vrot.slane %v373, 7
        %v464 = vrot.slane %v374, 7
        %v465 = vsel %vm420, %v463, %v464
        %v466 = vrot.slane %v375, 7
        %v467 = vrot.slane %v376, 7
        %v468 = vsel %vm420, %v466, %v467
        %v469 = vrot.slane %v377, 7
        %v470 = vrot.slane %v378, 7
        %v471 = vsel %vm420, %v469, %v470
        %v472 = vrot.slane %v382, 7
        %v473 = vrot.slane %v383, 7
        %v474 = vsel %vm420, %v472, %v473
        %v511 = vsel %vm420, %v379, %v421
        %v512 = vsel %vm420, %v347, %v424
        %v513 = vsel %vm420, %v349, %v427
        %v514 = vsel %vm420, %v351, %v430
        %v515 = vsel %vm420, %v353, %v433
        %v516 = vsel %vm420, %v355, %v436
        %v517 = vsel %vm420, %v357, %v439
        %v518 = vsel %vm420, %v359, %v442
        %v519 = vsel %vm420, %v361, %v445
        %v520 = vsel %vm420, %v363, %v448
        %v521 = vsel %vm420, %v365, %v451
        %v522 = vsel %vm420, %v367, %v454
        %v523 = vsel %vm420, %v369, %v457
        %v524 = vsel %vm420, %v371, %v460
        %v525 = vsel %vm420, %v373, %v463
        %v526 = vsel %vm420, %v375, %v466
        %v527 = vsel %vm420, %v377, %v469
        %v528 = vsel %vm420, %v382, %v472
        %vm529 = vcmask 1046528
        %v530 = vrot.slane %v379, 1
        %v531 = vrot.slane %v380, 1
        %v532 = vsel %vm529, %v530, %v531
        %v533 = vrot.slane %v347, 1
        %v534 = vrot.slane %v348, 1
        %v535 = vsel %vm529, %v533, %v534
        %v536 = vrot.slane %v349, 1
        %v537 = vrot.slane %v350, 1
        %v538 = vsel %vm529, %v536, %v537
        %v539 = vrot.slane %v351, 1
        %v540 = vrot.slane %v352, 1
        %v541 = vsel %vm529, %v539, %v540
        %v542 = vrot.slane %v353, 1
        %v543 = vrot.slane %v354, 1
        %v544 = vsel %vm529, %v542, %v543
        %v545 = vrot.slane %v355, 1
        %v546 = vrot.slane %v356, 1
        %v547 = vsel %vm529, %v545, %v546
        %v548 = vrot.slane %v357, 1
        %v549 = vrot.slane %v358, 1
        %v550 = vsel %vm529, %v548, %v549
        %v551 = vrot.slane %v359, 1
        %v552 = vrot.slane %v360, 1
        %v553 = vsel %vm529, %v551, %v552
        %v554 = vrot.slane %v361, 1
        %v555 = vrot.slane %v362, 1
        %v556 = vsel %vm529, %v554, %v555
        %v557 = vrot.slane %v363, 1
        %v558 = vrot.slane %v364, 1
        %v559 = vsel %vm529, %v557, %v558
        %v560 = vrot.slane %v365, 1
        %v561 = vrot.slane %v366, 1
        %v562 = vsel %vm529, %v560, %v561
        %v563 = vrot.slane %v367, 1
        %v564 = vrot.slane %v368, 1
        %v565 = vsel %vm529, %v563, %v564
        %v566 = vrot.slane %v369, 1
        %v567 = vrot.slane %v370, 1
        %v568 = vsel %vm529, %v566, %v567
        %v569 = vrot.slane %v371, 1
        %v570 = vrot.slane %v372, 1
        %v571 = vsel %vm529, %v569, %v570
        %v572 = vrot.slane %v373, 1
        %v573 = vrot.slane %v374, 1
        %v574 = vsel %vm529, %v572, %v573
        %v575 = vrot.slane %v375, 1
        %v576 = vrot.slane %v376, 1
        %v577 = vsel %vm529, %v575, %v576
        %v578 = vrot.slane %v377, 1
        %v579 = vrot.slane %v378, 1
        %v580 = vsel %vm529, %v578, %v579
        %v581 = vrot.slane %v382, 1
        %v582 = vrot.slane %v383, 1
        %v583 = vsel %vm529, %v581, %v582
        %v620 = vsel %vm529, %v531, %v380
        %v621 = vsel %vm529, %v534, %v348
        %v622 = vsel %vm529, %v537, %v350
        %v623 = vsel %vm529, %v540, %v352
        %v624 = vsel %vm529, %v543, %v354
        %v625 = vsel %vm529, %v546, %v356
        %v626 = vsel %vm529, %v549, %v358
        %v627 = vsel %vm529, %v552, %v360
        %v628 = vsel %vm529, %v555, %v362
        %v629 = vsel %vm529, %v558, %v364
        %v630 = vsel %vm529, %v561, %v366
        %v631 = vsel %vm529, %v564, %v368
        %v632 = vsel %vm529, %v567, %v370
        %v633 = vsel %vm529, %v570, %v372
        %v634 = vsel %vm529, %v573, %v374
        %v635 = vsel %vm529, %v576, %v376
        %v636 = vsel %vm529, %v579, %v378
        %v637 = vsel %vm529, %v582, %v383
        %v638 = vmul.f32 %v379, 0.75
        %v639 = vmul.f32 %v380, 0.75
        %v640 = vmul.f32 %v347, 0.75
        %v641 = vmul.f32 %v348, 0.75
        %v642 = vmul.f32 %v349, 0.75
        %v643 = vmul.f32 %v350, 0.75
        %v644 = vmul.f32 %v351, 0.75
        %v645 = vmul.f32 %v352, 0.75
        %v646 = vmul.f32 %v353, 0.75
        %v647 = vmul.f32 %v354, 0.75
        %v648 = vmul.f32 %v355, 0.75
        %v649 = vmul.f32 %v356, 0.75
        %v650 = vmul.f32 %v357, 0.75
        %v651 = vmul.f32 %v358, 0.75
        %v652 = vmul.f32 %v359, 0.75
        %v653 = vmul.f32 %v360, 0.75
        %v654 = vmul.f32 %v361, 0.75
        %v655 = vmul.f32 %v362, 0.75
        %v656 = vmul.f32 %v363, 0.75
        %v657 = vmul.f32 %v364, 0.75
        %v658 = vmul.f32 %v365, 0.75
        %v659 = vmul.f32 %v366, 0.75
        %v660 = vmul.f32 %v367, 0.75
        %v661 = vmul.f32 %v368, 0.75
        %v662 = vmul.f32 %v369, 0.75
        %v663 = vmul.f32 %v370, 0.75
        %v664 = vmul.f32 %v371, 0.75
        %v665 = vmul.f32 %v372, 0.75
        %v666 = vmul.f32 %v373, 0.75
        %v667 = vmul.f32 %v374, 0.75
        %v668 = vmul.f32 %v375, 0.75
        %v669 = vmul.f32 %v376, 0.75
        %v670 = vmul.f32 %v377, 0.75
        %v671 = vmul.f32 %v378, 0.75
        %v672 = vmul.f32 %v382, 0.75
        %v673 = vmul.f32 %v383, 0.75
        %v674 = vmul.f32 %v511, 0.25
        %v675 = vmul.f32 %v423, 0.25
        %v676 = vmul.f32 %v512, 0.25
        %v677 = vmul.f32 %v426, 0.25
        %v678 = vmul.f32 %v513, 0.25
        %v679 = vmul.f32 %v429, 0.25
        %v680 = vmul.f32 %v514, 0.25
        %v681 = vmul.f32 %v432, 0.25
        %v682 = vmul.f32 %v515, 0.25
        %v683 = vmul.f32 %v435, 0.25
        %v684 = vmul.f32 %v516, 0.25
        %v685 = vmul.f32 %v438, 0.25
        %v686 = vmul.f32 %v517, 0.25
        %v687 = vmul.f32 %v441, 0.25
        %v688 = vmul.f32 %v518, 0.25
        %v689 = vmul.f32 %v444, 0.25
        %v690 = vmul.f32 %v519, 0.25
        %v691 = vmul.f32 %v447, 0.25
        %v692 = vmul.f32 %v520, 0.25
        %v693 = vmul.f32 %v450, 0.25
        %v694 = vmul.f32 %v521, 0.25
        %v695 = vmul.f32 %v453, 0.25
        %v696 = vmul.f32 %v522, 0.25
        %v697 = vmul.f32 %v456, 0.25
        %v698 = vmul.f32 %v523, 0.25
        %v699 = vmul.f32 %v459, 0.25
        %v700 = vmul.f32 %v524, 0.25
        %v701 = vmul.f32 %v462, 0.25
        %v702 = vmul.f32 %v525, 0.25
        %v703 = vmul.f32 %v465, 0.25
        %v704 = vmul.f32 %v526, 0.25
        %v705 = vmul.f32 %v468, 0.25
        %v706 = vmul.f32 %v527, 0.25
        %v707 = vmul.f32 %v471, 0.25
        %v708 = vmul.f32 %v528, 0.25
        %v709 = vmul.f32 %v474, 0.25
        %v710 = vadd.f32 %v638, %v674
        %v711 = vadd.f32 %v639, %v675
        %v712 = vadd.f32 %v640, %v676
        %v713 = vadd.f32 %v641, %v677
        %v714 = vadd.f32 %v642, %v678
        %v715 = vadd.f32 %v643, %v679
        %v716 = vadd.f32 %v644, %v680
        %v717 = vadd.f32 %v645, %v681
        %v718 = vadd.f32 %v646, %v682
        %v719 = vadd.f32 %v647, %v683
        %v720 = vadd.f32 %v648, %v684
        %v721 = vadd.f32 %v649, %v685
        %v722 = vadd.f32 %v650, %v686
        %v723 = vadd.f32 %v651, %v687
        %v724 = vadd.f32 %v652, %v688
        %v725 = vadd.f32 %v653, %v689
        %v726 = vadd.f32 %v654, %v690
        %v727 = vadd.f32 %v655, %v691
        %v728 = vadd.f32 %v656, %v692
        %v729 = vadd.f32 %v657, %v693
        %v730 = vadd.f32 %v658, %v694
        %v731 = vadd.f32 %v659, %v695
        %v732 = vadd.f32 %v660, %v696
        %v733 = vadd.f32 %v661, %v697
        %v734 = vadd.f32 %v662, %v698
        %v735 = vadd.f32 %v663, %v699
        %v736 = vadd.f32 %v664, %v700
        %v737 = vadd.f32 %v665, %v701
        %v738 = vadd.f32 %v666, %v702
        %v739 = vadd.f32 %v667, %v703
        %v740 = vadd.f32 %v668, %v704
        %v741 = vadd.f32 %v669, %v705
        %v742 = vadd.f32 %v670, %v706
        %v743 = vadd.f32 %v671, %v707
        %v744 = vadd.f32 %v672, %v708
        %v745 = vadd.f32 %v673, %v709
        %v746 = vmul.f32 %v532, 0.25
        %v747 = vmul.f32 %v620, 0.25
        %v748 = vmul.f32 %v535, 0.25
        %v749 = vmul.f32 %v621, 0.25
        %v750 = vmul.f32 %v538, 0.25
        %v751 = vmul.f32 %v622, 0.25
        %v752 = vmul.f32 %v541, 0.25
        %v753 = vmul.f32 %v623, 0.25
        %v754 = vmul.f32 %v544, 0.25
        %v755 = vmul.f32 %v624, 0.25
        %v756 = vmul.f32 %v547, 0.25
        %v757 = vmul.f32 %v625, 0.25
        %v758 = vmul.f32 %v550, 0.25
        %v759 = vmul.f32 %v626, 0.25
        %v760 = vmul.f32 %v553, 0.25
        %v761 = vmul.f32 %v627, 0.25
        %v762 = vmul.f32 %v556, 0.25
        %v763 = vmul.f32 %v628, 0.25
        %v764 = vmul.f32 %v559, 0.25
        %v765 = vmul.f32 %v629, 0.25
        %v766 = vmul.f32 %v562, 0.25
        %v767 = vmul.f32 %v630, 0.25
        %v768 = vmul.f32 %v565, 0.25
        %v769 = vmul.f32 %v631, 0.25
        %v770 = vmul.f32 %v568, 0.25
        %v771 = vmul.f32 %v632, 0.25
        %v772 = vmul.f32 %v571, 0.25
        %v773 = vmul.f32 %v633, 0.25
        %v774 = vmul.f32 %v574, 0.25
        %v775 = vmul.f32 %v634, 0.25
        %v776 = vmul.f32 %v577, 0.25
        %v777 = vmul.f32 %v635, 0.25
        %v778 = vmul.f32 %v580, 0.25
        %v779 = vmul.f32 %v636, 0.25
        %v780 = vmul.f32 %v583, 0.25
        %v781 = vmul.f32 %v637, 0.25
        %v782 = vadd.f32 %v638, %v746
        %v783 = vadd.f32 %v639, %v747
        %v784 = vadd.f32 %v640, %v748
        %v785 = vadd.f32 %v641, %v749
        %v786 = vadd.f32 %v642, %v750
        %v787 = vadd.f32 %v643, %v751
        %v788 = vadd.f32 %v644, %v752
        %v789 = vadd.f32 %v645, %v753
        %v790 = vadd.f32 %v646, %v754
        %v791 = vadd.f32 %v647, %v755
        %v792 = vadd.f32 %v648, %v756
        %v793 = vadd.f32 %v649, %v757
        %v794 = vadd.f32 %v650, %v758
        %v795 = vadd.f32 %v651, %v759
        %v796 = vadd.f32 %v652, %v760
        %v797 = vadd.f32 %v653, %v761
        %v798 = vadd.f32 %v654, %v762
        %v799 = vadd.f32 %v655, %v763
        %v800 = vadd.f32 %v656, %v764
        %v801 = vadd.f32 %v657, %v765
        %v802 = vadd.f32 %v658, %v766
        %v803 = vadd.f32 %v659, %v767
        %v804 = vadd.f32 %v660, %v768
        %v805 = vadd.f32 %v661, %v769
        %v806 = vadd.f32 %v662, %v770
        %v807 = vadd.f32 %v663, %v771
        %v808 = vadd.f32 %v664, %v772
        %v809 = vadd.f32 %v665, %v773
        %v810 = vadd.f32 %v666, %v774
        %v811 = vadd.f32 %v667, %v775
        %v812 = vadd.f32 %v668, %v776
        %v813 = vadd.f32 %v669, %v777
        %v814 = vadd.f32 %v670, %v778
        %v815 = vadd.f32 %v671, %v779
        %v816 = vadd.f32 %v672, %v780
        %v817 = vadd.f32 %v673, %v781
        %854 = vrot.lane.b32.xlu0 %v782, 64
        %v855 = vpop.permute.xlu0 %854
        %856 = vrot.lane.b32.xlu0 %v783, 64
        %v857 = vpop.permute.xlu0 %856
        %858 = vrot.lane.b32.xlu0 %v784, 64
        %v859 = vpop.permute.xlu0 %858
        %860 = vrot.lane.b32.xlu0 %v785, 64
        %v861 = vpop.permute.xlu0 %860
        %862 = vrot.lane.b32.xlu0 %v786, 64
        %v863 = vpop.permute.xlu0 %862
        %864 = vrot.lane.b32.xlu0 %v787, 64
        %v865 = vpop.permute.xlu0 %864
        %866 = vrot.lane.b32.xlu0 %v788, 64
        %v867 = vpop.permute.xlu0 %866
        %868 = vrot.lane.b32.xlu0 %v789, 64
        %v869 = vpop.permute.xlu0 %868
        %870 = vrot.lane.b32.xlu0 %v790, 64
        %v871 = vpop.permute.xlu0 %870
        %872 = vrot.lane.b32.xlu0 %v791, 64
        %v873 = vpop.permute.xlu0 %872
        %874 = vrot.lane.b32.xlu0 %v792, 64
        %v875 = vpop.permute.xlu0 %874
        %876 = vrot.lane.b32.xlu0 %v793, 64
        %v877 = vpop.permute.xlu0 %876
        %878 = vrot.lane.b32.xlu0 %v794, 64
        %v879 = vpop.permute.xlu0 %878
        %880 = vrot.lane.b32.xlu0 %v795, 64
        %v881 = vpop.permute.xlu0 %880
        %882 = vrot.lane.b32.xlu0 %v796, 64
        %v883 = vpop.permute.xlu0 %882
        %884 = vrot.lane.b32.xlu0 %v797, 64
        %v885 = vpop.permute.xlu0 %884
        %886 = vrot.lane.b32.xlu0 %v798, 64
        %v887 = vpop.permute.xlu0 %886
        %888 = vrot.lane.b32.xlu0 %v799, 64
        %v889 = vpop.permute.xlu0 %888
        %890 = vrot.lane.b32.xlu0 %v800, 64
        %v891 = vpop.permute.xlu0 %890
        %892 = vrot.lane.b32.xlu0 %v801, 64
        %v893 = vpop.permute.xlu0 %892
        %894 = vrot.lane.b32.xlu0 %v802, 64
        %v895 = vpop.permute.xlu0 %894
        %896 = vrot.lane.b32.xlu0 %v803, 64
        %v897 = vpop.permute.xlu0 %896
        %898 = vrot.lane.b32.xlu0 %v804, 64
        %v899 = vpop.permute.xlu0 %898
        %900 = vrot.lane.b32.xlu0 %v805, 64
        %v901 = vpop.permute.xlu0 %900
        %902 = vrot.lane.b32.xlu0 %v806, 64
        %v903 = vpop.permute.xlu0 %902
        %904 = vrot.lane.b32.xlu0 %v807, 64
        %v905 = vpop.permute.xlu0 %904
        %906 = vrot.lane.b32.xlu0 %v808, 64
        %v907 = vpop.permute.xlu0 %906
        %908 = vrot.lane.b32.xlu0 %v809, 64
        %v909 = vpop.permute.xlu0 %908
        %910 = vrot.lane.b32.xlu0 %v810, 64
        %v911 = vpop.permute.xlu0 %910
        %912 = vrot.lane.b32.xlu0 %v811, 64
        %v913 = vpop.permute.xlu0 %912
        %914 = vrot.lane.b32.xlu0 %v812, 64
        %v915 = vpop.permute.xlu0 %914
        %916 = vrot.lane.b32.xlu0 %v813, 64
        %v917 = vpop.permute.xlu0 %916
        %918 = vrot.lane.b32.xlu0 %v814, 64
        %v919 = vpop.permute.xlu0 %918
        %920 = vrot.lane.b32.xlu0 %v815, 64
        %v921 = vpop.permute.xlu0 %920
        %922 = vrot.lane.b32.xlu0 %v816, 64
        %v923 = vpop.permute.xlu0 %922
        %924 = vrot.lane.b32.xlu0 %v817, 64
        %v925 = vpop.permute.xlu0 %924
        %vm962 = vcmask 523264
        %v963 = vsel %vm962, %v710, %v855
        %v964 = vsel %vm962, %v711, %v857
        %v965 = vsel %vm962, %v712, %v859
        %v966 = vsel %vm962, %v713, %v861
        %v967 = vsel %vm962, %v714, %v863
        %v968 = vsel %vm962, %v715, %v865
        %v969 = vsel %vm962, %v716, %v867
        %v970 = vsel %vm962, %v717, %v869
        %v971 = vsel %vm962, %v718, %v871
        %v972 = vsel %vm962, %v719, %v873
        %v973 = vsel %vm962, %v720, %v875
        %v974 = vsel %vm962, %v721, %v877
        %v975 = vsel %vm962, %v722, %v879
        %v976 = vsel %vm962, %v723, %v881
        %v977 = vsel %vm962, %v724, %v883
        %v978 = vsel %vm962, %v725, %v885
        %v979 = vsel %vm962, %v726, %v887
        %v980 = vsel %vm962, %v727, %v889
        %v981 = vsel %vm962, %v728, %v891
        %v982 = vsel %vm962, %v729, %v893
        %v983 = vsel %vm962, %v730, %v895
        %v984 = vsel %vm962, %v731, %v897
        %v985 = vsel %vm962, %v732, %v899
        %v986 = vsel %vm962, %v733, %v901
        %v987 = vsel %vm962, %v734, %v903
        %v988 = vsel %vm962, %v735, %v905
        %v989 = vsel %vm962, %v736, %v907
        %v990 = vsel %vm962, %v737, %v909
        %v991 = vsel %vm962, %v738, %v911
        %v992 = vsel %vm962, %v739, %v913
        %v993 = vsel %vm962, %v740, %v915
        %v994 = vsel %vm962, %v741, %v917
        %v995 = vsel %vm962, %v742, %v919
        %v996 = vsel %vm962, %v743, %v921
        %v997 = vsel %vm962, %v744, %v923
        %v998 = vsel %vm962, %v745, %v925
        %v999 = vmul.f32 %v965, 0.75
        %v1000 = vmul.f32 %v966, 0.75
        %v1001 = vmul.f32 %v967, 0.75
        %v1002 = vmul.f32 %v968, 0.75
        %v1003 = vmul.f32 %v969, 0.75
        %v1004 = vmul.f32 %v970, 0.75
        %v1005 = vmul.f32 %v971, 0.75
        %v1006 = vmul.f32 %v972, 0.75
        %v1007 = vmul.f32 %v973, 0.75
        %v1008 = vmul.f32 %v974, 0.75
        %v1009 = vmul.f32 %v975, 0.75
        %v1010 = vmul.f32 %v976, 0.75
        %v1011 = vmul.f32 %v977, 0.75
        %v1012 = vmul.f32 %v978, 0.75
        %v1013 = vmul.f32 %v979, 0.75
        %v1014 = vmul.f32 %v980, 0.75
        %v1015 = vmul.f32 %v981, 0.75
        %v1016 = vmul.f32 %v982, 0.75
        %v1017 = vmul.f32 %v983, 0.75
        %v1018 = vmul.f32 %v984, 0.75
        %v1019 = vmul.f32 %v985, 0.75
        %v1020 = vmul.f32 %v986, 0.75
        %v1021 = vmul.f32 %v987, 0.75
        %v1022 = vmul.f32 %v988, 0.75
        %v1023 = vmul.f32 %v989, 0.75
        %v1024 = vmul.f32 %v990, 0.75
        %v1025 = vmul.f32 %v991, 0.75
        %v1026 = vmul.f32 %v992, 0.75
        %v1027 = vmul.f32 %v993, 0.75
        %v1028 = vmul.f32 %v994, 0.75
        %v1029 = vmul.f32 %v995, 0.75
        %v1030 = vmul.f32 %v996, 0.75
        %v1031 = vmul.f32 %v963, 0.25
        %v1032 = vmul.f32 %v964, 0.25
        %v1033 = vmul.f32 %v965, 0.25
        %v1034 = vmul.f32 %v966, 0.25
        %v1035 = vmul.f32 %v967, 0.25
        %v1036 = vmul.f32 %v968, 0.25
        %v1037 = vmul.f32 %v969, 0.25
        %v1038 = vmul.f32 %v970, 0.25
        %v1039 = vmul.f32 %v971, 0.25
        %v1040 = vmul.f32 %v972, 0.25
        %v1041 = vmul.f32 %v973, 0.25
        %v1042 = vmul.f32 %v974, 0.25
        %v1043 = vmul.f32 %v975, 0.25
        %v1044 = vmul.f32 %v976, 0.25
        %v1045 = vmul.f32 %v977, 0.25
        %v1046 = vmul.f32 %v978, 0.25
        %v1047 = vmul.f32 %v979, 0.25
        %v1048 = vmul.f32 %v980, 0.25
        %v1049 = vmul.f32 %v981, 0.25
        %v1050 = vmul.f32 %v982, 0.25
        %v1051 = vmul.f32 %v983, 0.25
        %v1052 = vmul.f32 %v984, 0.25
        %v1053 = vmul.f32 %v985, 0.25
        %v1054 = vmul.f32 %v986, 0.25
        %v1055 = vmul.f32 %v987, 0.25
        %v1056 = vmul.f32 %v988, 0.25
        %v1057 = vmul.f32 %v989, 0.25
        %v1058 = vmul.f32 %v990, 0.25
        %v1059 = vmul.f32 %v991, 0.25
        %v1060 = vmul.f32 %v992, 0.25
        %v1061 = vmul.f32 %v993, 0.25
        %v1062 = vmul.f32 %v994, 0.25
        %v1063 = vadd.f32 %v999, %v1031
        %v1064 = vadd.f32 %v1000, %v1032
        %v1065 = vadd.f32 %v1001, %v1033
        %v1066 = vadd.f32 %v1002, %v1034
        %v1067 = vadd.f32 %v1003, %v1035
        %v1068 = vadd.f32 %v1004, %v1036
        %v1069 = vadd.f32 %v1005, %v1037
        %v1070 = vadd.f32 %v1006, %v1038
        %v1071 = vadd.f32 %v1007, %v1039
        %v1072 = vadd.f32 %v1008, %v1040
        %v1073 = vadd.f32 %v1009, %v1041
        %v1074 = vadd.f32 %v1010, %v1042
        %v1075 = vadd.f32 %v1011, %v1043
        %v1076 = vadd.f32 %v1012, %v1044
        %v1077 = vadd.f32 %v1013, %v1045
        %v1078 = vadd.f32 %v1014, %v1046
        %v1079 = vadd.f32 %v1015, %v1047
        %v1080 = vadd.f32 %v1016, %v1048
        %v1081 = vadd.f32 %v1017, %v1049
        %v1082 = vadd.f32 %v1018, %v1050
        %v1083 = vadd.f32 %v1019, %v1051
        %v1084 = vadd.f32 %v1020, %v1052
        %v1085 = vadd.f32 %v1021, %v1053
        %v1086 = vadd.f32 %v1022, %v1054
        %v1087 = vadd.f32 %v1023, %v1055
        %v1088 = vadd.f32 %v1024, %v1056
        %v1089 = vadd.f32 %v1025, %v1057
        %v1090 = vadd.f32 %v1026, %v1058
        %v1091 = vadd.f32 %v1027, %v1059
        %v1092 = vadd.f32 %v1028, %v1060
        %v1093 = vadd.f32 %v1029, %v1061
        %v1094 = vadd.f32 %v1030, %v1062
        %v1095 = vmul.f32 %v995, 0.25
        %v1096 = vmul.f32 %v996, 0.25
        %v1097 = vmul.f32 %v997, 0.25
        %v1098 = vmul.f32 %v998, 0.25
        %v1099 = vadd.f32 %v999, %v1035
        %v1100 = vadd.f32 %v1000, %v1036
        %v1101 = vadd.f32 %v1001, %v1037
        %v1102 = vadd.f32 %v1002, %v1038
        %v1103 = vadd.f32 %v1003, %v1039
        %v1104 = vadd.f32 %v1004, %v1040
        %v1105 = vadd.f32 %v1005, %v1041
        %v1106 = vadd.f32 %v1006, %v1042
        %v1107 = vadd.f32 %v1007, %v1043
        %v1108 = vadd.f32 %v1008, %v1044
        %v1109 = vadd.f32 %v1009, %v1045
        %v1110 = vadd.f32 %v1010, %v1046
        %v1111 = vadd.f32 %v1011, %v1047
        %v1112 = vadd.f32 %v1012, %v1048
        %v1113 = vadd.f32 %v1013, %v1049
        %v1114 = vadd.f32 %v1014, %v1050
        %v1115 = vadd.f32 %v1015, %v1051
        %v1116 = vadd.f32 %v1016, %v1052
        %v1117 = vadd.f32 %v1017, %v1053
        %v1118 = vadd.f32 %v1018, %v1054
        %v1119 = vadd.f32 %v1019, %v1055
        %v1120 = vadd.f32 %v1020, %v1056
        %v1121 = vadd.f32 %v1021, %v1057
        %v1122 = vadd.f32 %v1022, %v1058
        %v1123 = vadd.f32 %v1023, %v1059
        %v1124 = vadd.f32 %v1024, %v1060
        %v1125 = vadd.f32 %v1025, %v1061
        %v1126 = vadd.f32 %v1026, %v1062
        %v1127 = vadd.f32 %v1027, %v1095
        %v1128 = vadd.f32 %v1028, %v1096
        %v1129 = vadd.f32 %v1029, %v1097
        %v1130 = vadd.f32 %v1030, %v1098
        %v1131 = vld [vmem:[%s303] sm:$0xff]
        %v1132 = vld [vmem:[%s303 + $0x8] sm:$0xff]
        %v1133 = vld [vmem:[%s303 + $0x10] sm:$0xff]
        %v1134 = vld [vmem:[%s303 + $0x18] sm:$0xff]
        %v1135 = vld [vmem:[%s303 + $0x20] sm:$0xff]
        %v1136 = vld [vmem:[%s303 + $0x28] sm:$0xff]
        %v1137 = vld [vmem:[%s303 + $0x30] sm:$0xff]
        %v1138 = vld [vmem:[%s303 + $0x38] sm:$0xff]
        %v1139 = vld [vmem:[%s303 + $0x40] sm:$0xff]
        %v1140 = vld [vmem:[%s303 + $0x48] sm:$0xff]
        %v1141 = vld [vmem:[%s303 + $0x50] sm:$0xff]
        %v1142 = vld [vmem:[%s303 + $0x58] sm:$0xff]
        %v1143 = vld [vmem:[%s303 + $0x60] sm:$0xff]
        %v1144 = vld [vmem:[%s303 + $0x68] sm:$0xff]
        %v1145 = vld [vmem:[%s303 + $0x70] sm:$0xff]
        %v1146 = vld [vmem:[%s303 + $0x78] sm:$0xff]
        %v1147 = vld [vmem:[%s303 + $0x80] sm:$0xff]
        %v1148 = vld [vmem:[%s303 + $0x88] sm:$0xff]
        %v1149 = vld [vmem:[%s303 + $0x90] sm:$0xff]
        %v1150 = vld [vmem:[%s303 + $0x98] sm:$0xff]
        %v1151 = vld [vmem:[%s303 + $0xa0] sm:$0xff]
        %v1152 = vld [vmem:[%s303 + $0xa8] sm:$0xff]
        %v1153 = vld [vmem:[%s303 + $0xb0] sm:$0xff]
        %v1154 = vld [vmem:[%s303 + $0xb8] sm:$0xff]
        %v1155 = vld [vmem:[%s303 + $0xc0] sm:$0xff]
        %v1156 = vld [vmem:[%s303 + $0xc8] sm:$0xff]
        %v1157 = vld [vmem:[%s303 + $0xd0] sm:$0xff]
        %v1158 = vld [vmem:[%s303 + $0xd8] sm:$0xff]
        %v1159 = vld [vmem:[%s303 + $0xe0] sm:$0xff]
        %v1160 = vld [vmem:[%s303 + $0xe8] sm:$0xff]
        %v1161 = vld [vmem:[%s303 + $0xf0] sm:$0xff]
        %v1162 = vld [vmem:[%s303 + $0xf8] sm:$0xff]
        %v1163 = vld [vmem:[%s303 + $0x100] sm:$0xff]
        %v1164 = vld [vmem:[%s303 + $0x108] sm:$0xff]
        %v1165 = vld [vmem:[%s303 + $0x110] sm:$0xff]
        %v1166 = vld [vmem:[%s303 + $0x118] sm:$0xff]
        %v1167 = vld [vmem:[%s303 + $0x120] sm:$0xff]
        %v1168 = vld [vmem:[%s303 + $0x128] sm:$0xff]
        %v1169 = vld [vmem:[%s303 + $0x130] sm:$0xff]
        %v1170 = vld [vmem:[%s303 + $0x138] sm:$0xff]
        %v1171 = vld [vmem:[%s303 + $0x140] sm:$0xff]
        %v1172 = vld [vmem:[%s303 + $0x148] sm:$0xff]
        %v1173 = vld [vmem:[%s303 + $0x150] sm:$0xff]
        %v1174 = vld [vmem:[%s303 + $0x158] sm:$0xff]
        %v1175 = vld [vmem:[%s303 + $0x160] sm:$0xff]
        %v1176 = vld [vmem:[%s303 + $0x168] sm:$0xff]
        %v1177 = vld [vmem:[%s303 + $0x170] sm:$0xff]
        %v1178 = vld [vmem:[%s303 + $0x178] sm:$0xff]
        %v1179 = vld [vmem:[%s303 + $0x180] sm:$0xff]
        %v1180 = vld [vmem:[%s303 + $0x188] sm:$0xff]
        %v1181 = vld [vmem:[%s303 + $0x190] sm:$0xff]
        %v1182 = vld [vmem:[%s303 + $0x198] sm:$0xff]
        %v1183 = vld [vmem:[%s303 + $0x1a0] sm:$0xff]
        %v1184 = vld [vmem:[%s303 + $0x1a8] sm:$0xff]
        %v1185 = vld [vmem:[%s303 + $0x1b0] sm:$0xff]
        %v1186 = vld [vmem:[%s303 + $0x1b8] sm:$0xff]
        %v1187 = vld [vmem:[%s303 + $0x1c0] sm:$0xff]
        %v1188 = vld [vmem:[%s303 + $0x1c8] sm:$0xff]
        %v1189 = vld [vmem:[%s303 + $0x1d0] sm:$0xff]
        %v1190 = vld [vmem:[%s303 + $0x1d8] sm:$0xff]
        %v1191 = vld [vmem:[%s303 + $0x1e0] sm:$0xff]
        %v1192 = vld [vmem:[%s303 + $0x1e8] sm:$0xff]
        %v1193 = vld [vmem:[%s303 + $0x1f0] sm:$0xff]
        %v1194 = vld [vmem:[%s303 + $0x1f8] sm:$0xff]
        %v1195 = vld [vmem:[#allocation8] sm:$0xff]
        %v1196 = vld [vmem:[#allocation8 + $0x8] sm:$0xff]
        %v1197 = vld [vmem:[#allocation8 + $0x10] sm:$0xff]
        %v1198 = vld [vmem:[#allocation8 + $0x18] sm:$0xff]
        %v1199 = vld [vmem:[#allocation8 + $0x20] sm:$0xff]
        %v1200 = vld [vmem:[#allocation8 + $0x28] sm:$0xff]
        %v1201 = vld [vmem:[#allocation8 + $0x30] sm:$0xff]
        %v1202 = vld [vmem:[#allocation8 + $0x38] sm:$0xff]
        %v1203 = vld [vmem:[#allocation8 + $0x40] sm:$0xff]
        %v1204 = vld [vmem:[#allocation8 + $0x48] sm:$0xff]
        %v1205 = vld [vmem:[#allocation8 + $0x50] sm:$0xff]
        %v1206 = vld [vmem:[#allocation8 + $0x58] sm:$0xff]
        %v1207 = vld [vmem:[#allocation8 + $0x60] sm:$0xff]
        %v1208 = vld [vmem:[#allocation8 + $0x68] sm:$0xff]
        %v1209 = vld [vmem:[#allocation8 + $0x70] sm:$0xff]
        %v1210 = vld [vmem:[#allocation8 + $0x78] sm:$0xff]
        %1211 = vmatpush.msra.mxu0 %v1210
        %1212 = vmatpush.msra.mxu0 %v1209
        %1213 = vmatpush.msra.mxu0 %v1208
        %1214 = vmatpush.msra.mxu0 %v1207
        %1215 = vmatpush.msra.mxu0 %v1206
        %1216 = vmatpush.msra.mxu0 %v1205
        %1217 = vmatpush.msra.mxu0 %v1204
        %1218 = vmatpush.msra.mxu0 %v1203
        %1219 = vmatpush.msra.mxu0 %v1202
        %1220 = vmatpush.msra.mxu0 %v1201
        %1221 = vmatpush.msra.mxu0 %v1200
        %1222 = vmatpush.msra.mxu0 %v1199
        %1223 = vmatpush.msra.mxu0 %v1198
        %1224 = vmatpush.msra.mxu0 %v1197
        %1225 = vmatpush.msra.mxu0 %v1196
        %1226 = vmatpush.msra.mxu0 %v1195
        %1227 = vmatmul.f32.gmra.mxu0 %v1131
        %v1228 = vpop.f32.mrf.mxu0
        %v1229 = vadd.f32 0.0, %v1228
        %1230 = vmatmul.f32.gmra.mxu0 %v1132
        %v1231 = vpop.f32.mrf.mxu0
        %v1232 = vadd.f32 0.0, %v1231
        %1233 = vmatmul.f32.gmra.mxu0 %v1133
        %v1234 = vpop.f32.mrf.mxu0
        %v1235 = vadd.f32 0.0, %v1234
        %1236 = vmatmul.f32.gmra.mxu0 %v1134
        %v1237 = vpop.f32.mrf.mxu0
        %v1238 = vadd.f32 0.0, %v1237
        %1239 = vmatmul.f32.gmra.mxu0 %v1135
        %v1240 = vpop.f32.mrf.mxu0
        %v1241 = vadd.f32 0.0, %v1240
        %1242 = vmatmul.f32.gmra.mxu0 %v1136
        %v1243 = vpop.f32.mrf.mxu0
        %v1244 = vadd.f32 0.0, %v1243
        %1245 = vmatmul.f32.gmra.mxu0 %v1137
        %v1246 = vpop.f32.mrf.mxu0
        %v1247 = vadd.f32 0.0, %v1246
        %1248 = vmatmul.f32.gmra.mxu0 %v1138
        %v1249 = vpop.f32.mrf.mxu0
        %v1250 = vadd.f32 0.0, %v1249
        %1251 = vmatmul.f32.gmra.mxu0 %v1139
        %v1252 = vpop.f32.mrf.mxu0
        %v1253 = vadd.f32 0.0, %v1252
        %1254 = vmatmul.f32.gmra.mxu0 %v1140
        %v1255 = vpop.f32.mrf.mxu0
        %v1256 = vadd.f32 0.0, %v1255
        %1257 = vmatmul.f32.gmra.mxu0 %v1141
        %v1258 = vpop.f32.mrf.mxu0
        %v1259 = vadd.f32 0.0, %v1258
        %1260 = vmatmul.f32.gmra.mxu0 %v1142
        %v1261 = vpop.f32.mrf.mxu0
        %v1262 = vadd.f32 0.0, %v1261
        %1263 = vmatmul.f32.gmra.mxu0 %v1143
        %v1264 = vpop.f32.mrf.mxu0
        %v1265 = vadd.f32 0.0, %v1264
        %1266 = vmatmul.f32.gmra.mxu0 %v1144
        %v1267 = vpop.f32.mrf.mxu0
        %v1268 = vadd.f32 0.0, %v1267
        %1269 = vmatmul.f32.gmra.mxu0 %v1145
        %v1270 = vpop.f32.mrf.mxu0
        %v1271 = vadd.f32 0.0, %v1270
        %1272 = vmatmul.f32.gmra.mxu0 %v1146
        %v1273 = vpop.f32.mrf.mxu0
        %v1274 = vadd.f32 0.0, %v1273
        %1275 = vmatmul.f32.gmra.mxu0 %v1147
        %v1276 = vpop.f32.mrf.mxu0
        %v1277 = vadd.f32 0.0, %v1276
        %1278 = vmatmul.f32.gmra.mxu0 %v1148
        %v1279 = vpop.f32.mrf.mxu0
        %v1280 = vadd.f32 0.0, %v1279
        %1281 = vmatmul.f32.gmra.mxu0 %v1149
        %v1282 = vpop.f32.mrf.mxu0
        %v1283 = vadd.f32 0.0, %v1282
        %1284 = vmatmul.f32.gmra.mxu0 %v1150
        %v1285 = vpop.f32.mrf.mxu0
        %v1286 = vadd.f32 0.0, %v1285
        %1287 = vmatmul.f32.gmra.mxu0 %v1151
        %v1288 = vpop.f32.mrf.mxu0
        %v1289 = vadd.f32 0.0, %v1288
        %1290 = vmatmul.f32.gmra.mxu0 %v1152
        %v1291 = vpop.f32.mrf.mxu0
        %v1292 = vadd.f32 0.0, %v1291
        %1293 = vmatmul.f32.gmra.mxu0 %v1153
        %v1294 = vpop.f32.mrf.mxu0
        %v1295 = vadd.f32 0.0, %v1294
        %1296 = vmatmul.f32.gmra.mxu0 %v1154
        %v1297 = vpop.f32.mrf.mxu0
        %v1298 = vadd.f32 0.0, %v1297
        %1299 = vmatmul.f32.gmra.mxu0 %v1155
        %v1300 = vpop.f32.mrf.mxu0
        %v1301 = vadd.f32 0.0, %v1300
        %1302 = vmatmul.f32.gmra.mxu0 %v1156
        %v1303 = vpop.f32.mrf.mxu0
        %v1304 = vadd.f32 0.0, %v1303
        %1305 = vmatmul.f32.gmra.mxu0 %v1157
        %v1306 = vpop.f32.mrf.mxu0
        %v1307 = vadd.f32 0.0, %v1306
        %1308 = vmatmul.f32.gmra.mxu0 %v1158
        %v1309 = vpop.f32.mrf.mxu0
        %v1310 = vadd.f32 0.0, %v1309
        %1311 = vmatmul.f32.gmra.mxu0 %v1159
        %v1312 = vpop.f32.mrf.mxu0
        %v1313 = vadd.f32 0.0, %v1312
        %1314 = vmatmul.f32.gmra.mxu0 %v1160
        %v1315 = vpop.f32.mrf.mxu0
        %v1316 = vadd.f32 0.0, %v1315
        %1317 = vmatmul.f32.gmra.mxu0 %v1161
        %v1318 = vpop.f32.mrf.mxu0
        %v1319 = vadd.f32 0.0, %v1318
        %1320 = vmatmul.f32.gmra.mxu0 %v1162
        %v1321 = vpop.f32.mrf.mxu0
        %v1322 = vadd.f32 0.0, %v1321
        %1323 = vmatmul.f32.gmra.mxu0 %v1163
        %v1324 = vpop.f32.mrf.mxu0
        %v1325 = vadd.f32 0.0, %v1324
        %1326 = vmatmul.f32.gmra.mxu0 %v1164
        %v1327 = vpop.f32.mrf.mxu0
        %v1328 = vadd.f32 0.0, %v1327
        %1329 = vmatmul.f32.gmra.mxu0 %v1165
        %v1330 = vpop.f32.mrf.mxu0
        %v1331 = vadd.f32 0.0, %v1330
        %1332 = vmatmul.f32.gmra.mxu0 %v1166
        %v1333 = vpop.f32.mrf.mxu0
        %v1334 = vadd.f32 0.0, %v1333
        %1335 = vmatmul.f32.gmra.mxu0 %v1167
        %v1336 = vpop.f32.mrf.mxu0
        %v1337 = vadd.f32 0.0, %v1336
        %1338 = vmatmul.f32.gmra.mxu0 %v1168
        %v1339 = vpop.f32.mrf.mxu0
        %v1340 = vadd.f32 0.0, %v1339
        %1341 = vmatmul.f32.gmra.mxu0 %v1169
        %v1342 = vpop.f32.mrf.mxu0
        %v1343 = vadd.f32 0.0, %v1342
        %1344 = vmatmul.f32.gmra.mxu0 %v1170
        %v1345 = vpop.f32.mrf.mxu0
        %v1346 = vadd.f32 0.0, %v1345
        %1347 = vmatmul.f32.gmra.mxu0 %v1171
        %v1348 = vpop.f32.mrf.mxu0
        %v1349 = vadd.f32 0.0, %v1348
        %1350 = vmatmul.f32.gmra.mxu0 %v1172
        %v1351 = vpop.f32.mrf.mxu0
        %v1352 = vadd.f32 0.0, %v1351
        %1353 = vmatmul.f32.gmra.mxu0 %v1173
        %v1354 = vpop.f32.mrf.mxu0
        %v1355 = vadd.f32 0.0, %v1354
        %1356 = vmatmul.f32.gmra.mxu0 %v1174
        %v1357 = vpop.f32.mrf.mxu0
        %v1358 = vadd.f32 0.0, %v1357
        %1359 = vmatmul.f32.gmra.mxu0 %v1175
        %v1360 = vpop.f32.mrf.mxu0
        %v1361 = vadd.f32 0.0, %v1360
        %1362 = vmatmul.f32.gmra.mxu0 %v1176
        %v1363 = vpop.f32.mrf.mxu0
        %v1364 = vadd.f32 0.0, %v1363
        %1365 = vmatmul.f32.gmra.mxu0 %v1177
        %v1366 = vpop.f32.mrf.mxu0
        %v1367 = vadd.f32 0.0, %v1366
        %1368 = vmatmul.f32.gmra.mxu0 %v1178
        %v1369 = vpop.f32.mrf.mxu0
        %v1370 = vadd.f32 0.0, %v1369
        %1371 = vmatmul.f32.gmra.mxu0 %v1179
        %v1372 = vpop.f32.mrf.mxu0
        %v1373 = vadd.f32 0.0, %v1372
        %1374 = vmatmul.f32.gmra.mxu0 %v1180
        %v1375 = vpop.f32.mrf.mxu0
        %v1376 = vadd.f32 0.0, %v1375
        %1377 = vmatmul.f32.gmra.mxu0 %v1181
        %v1378 = vpop.f32.mrf.mxu0
        %v1379 = vadd.f32 0.0, %v1378
        %1380 = vmatmul.f32.gmra.mxu0 %v1182
        %v1381 = vpop.f32.mrf.mxu0
        %v1382 = vadd.f32 0.0, %v1381
        %1383 = vmatmul.f32.gmra.mxu0 %v1183
        %v1384 = vpop.f32.mrf.mxu0
        %v1385 = vadd.f32 0.0, %v1384
        %1386 = vmatmul.f32.gmra.mxu0 %v1184
        %v1387 = vpop.f32.mrf.mxu0
        %v1388 = vadd.f32 0.0, %v1387
        %1389 = vmatmul.f32.gmra.mxu0 %v1185
        %v1390 = vpop.f32.mrf.mxu0
        %v1391 = vadd.f32 0.0, %v1390
        %1392 = vmatmul.f32.gmra.mxu0 %v1186
        %v1393 = vpop.f32.mrf.mxu0
        %v1394 = vadd.f32 0.0, %v1393
        %1395 = vmatmul.f32.gmra.mxu0 %v1187
        %v1396 = vpop.f32.mrf.mxu0
        %v1397 = vadd.f32 0.0, %v1396
        %1398 = vmatmul.f32.gmra.mxu0 %v1188
        %v1399 = vpop.f32.mrf.mxu0
        %v1400 = vadd.f32 0.0, %v1399
        %1401 = vmatmul.f32.gmra.mxu0 %v1189
        %v1402 = vpop.f32.mrf.mxu0
        %v1403 = vadd.f32 0.0, %v1402
        %1404 = vmatmul.f32.gmra.mxu0 %v1190
        %v1405 = vpop.f32.mrf.mxu0
        %v1406 = vadd.f32 0.0, %v1405
        %1407 = vmatmul.f32.gmra.mxu0 %v1191
        %v1408 = vpop.f32.mrf.mxu0
        %v1409 = vadd.f32 0.0, %v1408
        %1410 = vmatmul.f32.gmra.mxu0 %v1192
        %v1411 = vpop.f32.mrf.mxu0
        %v1412 = vadd.f32 0.0, %v1411
        %1413 = vmatmul.f32.gmra.mxu0 %v1193
        %v1414 = vpop.f32.mrf.mxu0
        %v1415 = vadd.f32 0.0, %v1414
        %1416 = vmatmul.f32.gmra.mxu0 %v1194
        %v1417 = vpop.f32.mrf.mxu0
        %v1418 = vadd.f32 0.0, %v1417
        %1419 = vdwg.mxu0
        %v1420 = vadd.f32 %v1229, %v1063
        %v1421 = vadd.f32 %v1232, %v1064
        %v1422 = vadd.f32 %v1241, %v1065
        %v1423 = vadd.f32 %v1244, %v1066
        %v1424 = vadd.f32 %v1253, %v1067
        %v1425 = vadd.f32 %v1256, %v1068
        %v1426 = vadd.f32 %v1265, %v1069
        %v1427 = vadd.f32 %v1268, %v1070
        %v1428 = vadd.f32 %v1277, %v1071
        %v1429 = vadd.f32 %v1280, %v1072
        %v1430 = vadd.f32 %v1289, %v1073
        %v1431 = vadd.f32 %v1292, %v1074
        %v1432 = vadd.f32 %v1301, %v1075
        %v1433 = vadd.f32 %v1304, %v1076
        %v1434 = vadd.f32 %v1313, %v1077
        %v1435 = vadd.f32 %v1316, %v1078
        %v1436 = vadd.f32 %v1325, %v1079
        %v1437 = vadd.f32 %v1328, %v1080
        %v1438 = vadd.f32 %v1337, %v1081
        %v1439 = vadd.f32 %v1340, %v1082
        %v1440 = vadd.f32 %v1349, %v1083
        %v1441 = vadd.f32 %v1352, %v1084
        %v1442 = vadd.f32 %v1361, %v1085
        %v1443 = vadd.f32 %v1364, %v1086
        %v1444 = vadd.f32 %v1373, %v1087
        %v1445 = vadd.f32 %v1376, %v1088
        %v1446 = vadd.f32 %v1385, %v1089
        %v1447 = vadd.f32 %v1388, %v1090
        %v1448 = vadd.f32 %v1397, %v1091
        %v1449 = vadd.f32 %v1400, %v1092
        %v1450 = vadd.f32 %v1409, %v1093
        %v1451 = vadd.f32 %v1412, %v1094
        %1452 = vst [vmem:[%s343] sm:$0xff] %v1420
        %1453 = vst [vmem:[%s343 + $0x8] sm:$0xff] %v1421
        %1454 = vst [vmem:[%s343 + $0x20] sm:$0xff] %v1422
        %1455 = vst [vmem:[%s343 + $0x28] sm:$0xff] %v1423
        %1456 = vst [vmem:[%s343 + $0x40] sm:$0xff] %v1424
        %1457 = vst [vmem:[%s343 + $0x48] sm:$0xff] %v1425
        %1458 = vst [vmem:[%s343 + $0x60] sm:$0xff] %v1426
        %1459 = vst [vmem:[%s343 + $0x68] sm:$0xff] %v1427
        %1460 = vst [vmem:[%s343 + $0x80] sm:$0xff] %v1428
        %1461 = vst [vmem:[%s343 + $0x88] sm:$0xff] %v1429
        %1462 = vst [vmem:[%s343 + $0xa0] sm:$0xff] %v1430
        %1463 = vst [vmem:[%s343 + $0xa8] sm:$0xff] %v1431
        %1464 = vst [vmem:[%s343 + $0xc0] sm:$0xff] %v1432
        %1465 = vst [vmem:[%s343 + $0xc8] sm:$0xff] %v1433
        %1466 = vst [vmem:[%s343 + $0xe0] sm:$0xff] %v1434
        %1467 = vst [vmem:[%s343 + $0xe8] sm:$0xff] %v1435
        %1468 = vst [vmem:[%s343 + $0x100] sm:$0xff] %v1436
        %1469 = vst [vmem:[%s343 + $0x108] sm:$0xff] %v1437
        %1470 = vst [vmem:[%s343 + $0x120] sm:$0xff] %v1438
        %1471 = vst [vmem:[%s343 + $0x128] sm:$0xff] %v1439
        %1472 = vst [vmem:[%s343 + $0x140] sm:$0xff] %v1440
        %1473 = vst [vmem:[%s343 + $0x148] sm:$0xff] %v1441
        %1474 = vst [vmem:[%s343 + $0x160] sm:$0xff] %v1442
        %1475 = vst [vmem:[%s343 + $0x168] sm:$0xff] %v1443
        %1476 = vst [vmem:[%s343 + $0x180] sm:$0xff] %v1444
        %1477 = vst [vmem:[%s343 + $0x188] sm:$0xff] %v1445
        %1478 = vst [vmem:[%s343 + $0x1a0] sm:$0xff] %v1446
        %1479 = vst [vmem:[%s343 + $0x1a8] sm:$0xff] %v1447
        %1480 = vst [vmem:[%s343 + $0x1c0] sm:$0xff] %v1448
        %1481 = vst [vmem:[%s343 + $0x1c8] sm:$0xff] %v1449
        %1482 = vst [vmem:[%s343 + $0x1e0] sm:$0xff] %v1450
        %1483 = vst [vmem:[%s343 + $0x1e8] sm:$0xff] %v1451
        %v1484 = vadd.f32 %v1235, %v1099
        %v1485 = vadd.f32 %v1238, %v1100
        %v1486 = vadd.f32 %v1247, %v1101
        %v1487 = vadd.f32 %v1250, %v1102
        %v1488 = vadd.f32 %v1259, %v1103
        %v1489 = vadd.f32 %v1262, %v1104
        %v1490 = vadd.f32 %v1271, %v1105
        %v1491 = vadd.f32 %v1274, %v1106
        %v1492 = vadd.f32 %v1283, %v1107
        %v1493 = vadd.f32 %v1286, %v1108
        %v1494 = vadd.f32 %v1295, %v1109
        %v1495 = vadd.f32 %v1298, %v1110
        %v1496 = vadd.f32 %v1307, %v1111
        %v1497 = vadd.f32 %v1310, %v1112
        %v1498 = vadd.f32 %v1319, %v1113
        %v1499 = vadd.f32 %v1322, %v1114
        %v1500 = vadd.f32 %v1331, %v1115
        %v1501 = vadd.f32 %v1334, %v1116
        %v1502 = vadd.f32 %v1343, %v1117
        %v1503 = vadd.f32 %v1346, %v1118
        %v1504 = vadd.f32 %v1355, %v1119
        %v1505 = vadd.f32 %v1358, %v1120
        %v1506 = vadd.f32 %v1367, %v1121
        %v1507 = vadd.f32 %v1370, %v1122
        %v1508 = vadd.f32 %v1379, %v1123
        %v1509 = vadd.f32 %v1382, %v1124
        %v1510 = vadd.f32 %v1391, %v1125
        %v1511 = vadd.f32 %v1394, %v1126
        %v1512 = vadd.f32 %v1403, %v1127
        %v1513 = vadd.f32 %v1406, %v1128
        %v1514 = vadd.f32 %v1415, %v1129
        %v1515 = vadd.f32 %v1418, %v1130
        %s1516 = scalar_lea.vmem %s343, 16 [#allocation10]
        %1517 = vst [vmem:[%s1516] sm:$0xff] %v1484
        %1518 = vst [vmem:[%s1516 + $0x8] sm:$0xff] %v1485
        %1519 = vst [vmem:[%s1516 + $0x20] sm:$0xff] %v1486
        %1520 = vst [vmem:[%s1516 + $0x28] sm:$0xff] %v1487
        %1521 = vst [vmem:[%s1516 + $0x40] sm:$0xff] %v1488
        %1522 = vst [vmem:[%s1516 + $0x48] sm:$0xff] %v1489
        %1523 = vst [vmem:[%s1516 + $0x60] sm:$0xff] %v1490
        %1524 = vst [vmem:[%s1516 + $0x68] sm:$0xff] %v1491
        %1525 = vst [vmem:[%s1516 + $0x80] sm:$0xff] %v1492
        %1526 = vst [vmem:[%s1516 + $0x88] sm:$0xff] %v1493
        %1527 = vst [vmem:[%s1516 + $0xa0] sm:$0xff] %v1494
        %1528 = vst [vmem:[%s1516 + $0xa8] sm:$0xff] %v1495
        %1529 = vst [vmem:[%s1516 + $0xc0] sm:$0xff] %v1496
        %1530 = vst [vmem:[%s1516 + $0xc8] sm:$0xff] %v1497
        %1531 = vst [vmem:[%s1516 + $0xe0] sm:$0xff] %v1498
        %1532 = vst [vmem:[%s1516 + $0xe8] sm:$0xff] %v1499
        %1533 = vst [vmem:[%s1516 + $0x100] sm:$0xff] %v1500
        %1534 = vst [vmem:[%s1516 + $0x108] sm:$0xff] %v1501
        %1535 = vst [vmem:[%s1516 + $0x120] sm:$0xff] %v1502
        %1536 = vst [vmem:[%s1516 + $0x128] sm:$0xff] %v1503
        %1537 = vst [vmem:[%s1516 + $0x140] sm:$0xff] %v1504
        %1538 = vst [vmem:[%s1516 + $0x148] sm:$0xff] %v1505
        %1539 = vst [vmem:[%s1516 + $0x160] sm:$0xff] %v1506
        %1540 = vst [vmem:[%s1516 + $0x168] sm:$0xff] %v1507
        %1541 = vst [vmem:[%s1516 + $0x180] sm:$0xff] %v1508
        %1542 = vst [vmem:[%s1516 + $0x188] sm:$0xff] %v1509
        %1543 = vst [vmem:[%s1516 + $0x1a0] sm:$0xff] %v1510
        %1544 = vst [vmem:[%s1516 + $0x1a8] sm:$0xff] %v1511
        %1545 = vst [vmem:[%s1516 + $0x1c0] sm:$0xff] %v1512
        %1546 = vst [vmem:[%s1516 + $0x1c8] sm:$0xff] %v1513
        %1547 = vst [vmem:[%s1516 + $0x1e0] sm:$0xff] %v1514
        %1548 = vst [vmem:[%s1516 + $0x1e8] sm:$0xff] %v1515
        %s1549 = sand.u32 %s152, 1
        %s1550 = scalar_lea.sflag [#allocation4], %s1549
        %s1551 = sand.u32 %s152, 1
        %s1552 = smul.addr %s1551, 512
        %s1553 = scalar_lea.vmem [#allocation10], %s1552
        // Predicated region
        $region53: #{tpu_custom_call.1} parent=35 // pred_check
          %p1554 = pneg %p162
        $region54: #{tpu_custom_call.1} parent=35 // pred_check_branch
          %1556 = sbr.rel (%p1554) target = $region56
        $region55: #{tpu_custom_call.1} parent=35 // pred_region
          %s1557 = smul.u32 16, %s30
          %1559 = vsyncadd %s1550, 0
          %s1560 = smul.addr %s1557, 4
          %s1561 = smul.addr %s29, 64
          %s1562 = sadd.s32 %s1560, %s1561
          %s1563 = smul.addr %s1562, 8
          %s1564 = scalar_lea.hbm %s4, %s1563
          %s1565 = sshll.u32 %s1553, 4
          %s1566 = int_to_ptr.vmem [resolvable:$true] %s1565
          %s1567 = sshll.u32 %s1564, 4
          %s1568 = int_to_ptr.hbm [resolvable:$true] %s1567
          %1573 = dma.vmem_to_hbm [thread:$0]  %s1566, 8192, %s1568, %s1550, 128, 128, 8
        $region56: #{tpu_custom_call.1} parent=35 // pred_fallthru
          _
      $region36: #{tpu_custom_call.1} parent=5 // pred_fallthru
        _
      %p1574 = scmp.le.s32.totalorder 2, %s20
      // Predicated region
      $region57: #{tpu_custom_call.1} parent=5 // pred_check
        %p1575 = pneg %p1574
      $region58: #{tpu_custom_call.1} parent=5 // pred_check_branch
        %1577 = sbr.rel (%p1575) target = $region60
      $region59: #{tpu_custom_call.1} parent=5 // pred_region
        %s1578 = ssub.s32 %s20, 2
        // Predicated region
        $region61: #{tpu_custom_call.1} parent=59 // pred_check
          %p1579 = pneg %p168
        $region62: #{tpu_custom_call.1} parent=59 // pred_check_branch
          %1581 = sbr.rel (%p1579) target = $region64
        $region63: #{tpu_custom_call.1} parent=59 // pred_region
          %s1582 = sand.u32 %s153, 1
          %s1583 = scalar_lea.sflag [#allocation4], %s1582
          %s1584 = sand.u32 %s153, 1
          %s1585 = smul.addr %s1584, 512
          %s1586 = scalar_lea.vmem [#allocation10], %s1585
          %1588 = dma.done %s1583, 8192
        $region64: #{tpu_custom_call.1} parent=59 // pred_fallthru
          _
      $region60: #{tpu_custom_call.1} parent=5 // pred_fallthru
        _
    $region6: #{tpu_custom_call.1} parent=1 // loop_footer
      %s24 = sadd.s32 1, %s20
    $region7: #{tpu_custom_call.1} parent=1 // loop_footer_branch
      %19 = sbr.rel target = $region3
    $region8: #{tpu_custom_call.1} parent=1 // loop_exit
      _
    %1589 = vsyncpa [#allocation3], 1
    %s1590 = scalar_lea.sflag [#allocation3], 1
    %1591 = vsyncpa %s1590, 1
    %1592 = vsyncpa [#allocation6], 1
    %s1593 = scalar_lea.sflag [#allocation6], 1
    %1594 = vsyncpa %s1593, 1
    %1595 = vsyncpa [#allocation9], 1
    %1596 = vsyncpa [#allocation4], 1
    %s1597 = scalar_lea.sflag [#allocation4], 1
    %1598 = vsyncpa %s1597, 1

</llo_original>
